<compile_context>
chip_gen: v7x
topology: tpu7x:2x2x1
jax: 0.10.0
libtpu: 0.0.40
codegen_flags: <defaults>
</compile_context>

<pallas_src>
import functools

import numpy as np
import jax
import jax.numpy as jnp
from jax.experimental import pallas as pl
from jax.experimental.pallas import tpu as pltpu

EPS = 1e-3
KW = 7
PAD = 3


def _conv_bn_kernel(x_ref, w_ref, gamma_ref, beta_ref, mask_ref, o_ref, *,
                    inv_count, eps):
    # x_ref:     (KW*Cin, n_cols) bf16  channel-major im2col slab (width-padded,
    #                                   flattened spatial; 7 shifted views stacked
    #                                   along the contraction axis)
    # w_ref:     (Cout, KW*Cin)   bf16  flattened conv weights
    # gamma_ref: (Cout, 1) f32 ; beta_ref: (Cout, 1) f32
    # mask_ref:  (n_cols, 1) f32  -- 1.0 on the N*H*W valid output columns
    # o_ref:     (Cout, n_cols) f32 -- conv+BN output, channel-major (NCHW order)

    # 1x7 conv as a single K=7*Cin MXU matmul, f32 accumulation.
    acc = jnp.dot(w_ref[...], x_ref[...],
                  preferred_element_type=jnp.float32)            # (Cout, n_cols)

    # One-pass batch-norm statistics over the valid columns only.
    # Reductions run on the MXU (matrix-vector dots against the 0/1 mask column)
    # instead of cross-lane XLU sums; masking is folded into the reduction.
    mask_col = mask_ref[...]                                      # (n_cols, 1)
    s1 = jnp.dot(acc, mask_col, preferred_element_type=jnp.float32)        # (Cout,1)
    s2 = jnp.dot(acc * acc, mask_col, preferred_element_type=jnp.float32)  # (Cout,1)

    mean = s1 * inv_count
    var = jnp.maximum(s2 * inv_count - mean * mean, 0.0)   # biased var (norm path)
    inv_std = jax.lax.rsqrt(var + eps)                      # EUP
    scale = gamma_ref[...] * inv_std                         # (Cout, 1)
    shift = beta_ref[...] - mean * scale
    o_ref[...] = acc * scale + shift     # invalid columns are discarded in wrapper


def prepare_weight(weight):
    """Param-init-time transform: (Cout,Cin,1,KW) -> (Cout, KW*Cin) bf16.

    Hoisted out of the jitted forward so it is not re-executed per call.
    Row layout matches the im2col slab: index [cout, kw*Cin + cin].
    """
    Cout, Cin, KH, KW_ = weight.shape
    assert (KH, KW_) == (1, KW)
    w = jnp.transpose(weight[:, :, 0, :], (0, 2, 1))         # (Cout, KW, Cin)
    return w.reshape(Cout, KW * Cin).astype(jnp.bfloat16)


def conv2d_1x7_batchnorm(x_nchw, w_flat, gamma, beta):
    """x_nchw: (N,Cin,H,W) f32; w_flat: (Cout, KW*Cin) bf16 (see prepare_weight)."""
    N, Cin, H, W = x_nchw.shape
    Cout, KCin = w_flat.shape
    assert KCin == KW * Cin

    Wp = W + 2 * PAD                          # padded width per image row (18)
    n_valid = N * H * Wp                      # flat padded spatial size    (216)
    n_cols = ((n_valid + 127) // 128) * 128   # lane-dense output width     (256)
    x_cols = n_cols + (KW - 1)                # so every shifted view fits  (262)

    # ---- input prep: NO spatial transpose (channel axis already major for N==1) ----
    xc = jnp.transpose(x_nchw, (1, 0, 2, 3))                     # (Cin,N,H,W)
    xc = jnp.pad(xc, ((0, 0), (0, 0), (0, 0), (PAD, PAD)))       # (Cin,N,H,Wp)
    xf = xc.reshape(Cin, n_valid)
    xf = jnp.pad(xf, ((0, 0), (0, x_cols - n_valid)))
    xf = xf.astype(jnp.bfloat16)                                 # (Cin, x_cols)

    # ---- im2col slab: stack 7 shifted views along the contraction axis ----
    # (all lane-unaligned slicing happens here in one XLA fusion, not in-kernel)
    slab = jnp.concatenate([xf[:, kw:kw + n_cols] for kw in range(KW)], axis=0)
    # slab: (KW*Cin, n_cols) bf16

    gamma2 = gamma.reshape(Cout, 1).astype(jnp.float32)
    beta2 = beta.reshape(Cout, 1).astype(jnp.float32)

    # Valid-output-column mask as a column vector (static -> XLA constant).
    cols = np.arange(n_cols)
    mask_np = ((cols % Wp) < W) & (cols < n_valid)
    mask_col = jnp.asarray(mask_np.astype(np.float32)).reshape(n_cols, 1)

    kernel = functools.partial(
        _conv_bn_kernel, inv_count=1.0 / float(N * H * W), eps=EPS)

    out_t = pl.pallas_call(
        kernel,
        out_shape=jax.ShapeDtypeStruct((Cout, n_cols), jnp.float32),
        grid_spec=pltpu.PrefetchScalarGridSpec(
            num_scalar_prefetch=0,
            grid=(1,),
            in_specs=[
                pl.BlockSpec((KW * Cin, n_cols), lambda i: (0, 0)),
                pl.BlockSpec((Cout, KW * Cin), lambda i: (0, 0)),
                pl.BlockSpec((Cout, 1), lambda i: (0, 0)),
                pl.BlockSpec((Cout, 1), lambda i: (0, 0)),
                pl.BlockSpec((n_cols, 1), lambda i: (0, 0)),
            ],
            out_specs=pl.BlockSpec((Cout, n_cols), lambda i: (0, 0)),
        ),
        compiler_params=pltpu.CompilerParams(
            dimension_semantics=("arbitrary",)),
    )(slab, w_flat, gamma2, beta2, mask_col)

    # ---- output: channel-major flat -> NCHW; one strided slice, no transpose ----
    out = out_t[:, :n_valid].reshape(Cout, N, H, Wp)[:, :, :, :W]  # (Cout,N,H,W)
    out = jnp.transpose(out, (1, 0, 2, 3))                         # free for N==1
    return out


def _reference(x, weight, gamma, beta):
    y = jax.lax.conv_general_dilated(
        x, weight, window_strides=(1, 1), padding=((0, 0), (PAD, PAD)),
        dimension_numbers=("NCHW", "OIHW", "NCHW"),
        precision=jax.lax.Precision.HIGHEST)
    mean = jnp.mean(y, axis=(0, 2, 3), keepdims=True)
    var = jnp.mean((y - mean) ** 2, axis=(0, 2, 3), keepdims=True)
    return ((y - mean) * jax.lax.rsqrt(var + EPS)
            * gamma.reshape(1, -1, 1, 1) + beta.reshape(1, -1, 1, 1))


if __name__ == "__main__":
    key = jax.random.PRNGKey(0)
    k_x, k_w, k_g, k_b = jax.random.split(key, 4)

    # shapes implied by the module's forward: x201 = randn([1, 160, 12, 12])
    N, Cin, H, W = 1, 160, 12, 12
    Cout = 192

    x = jax.random.normal(k_x, (N, Cin, H, W), dtype=jnp.float32)
    weight = jax.random.normal(k_w, (Cout, Cin, 1, KW), dtype=jnp.float32) * 0.05
    gamma = 1.0 + 0.1 * jax.random.normal(k_g, (Cout,), dtype=jnp.float32)
    beta = 0.1 * jax.random.normal(k_b, (Cout,), dtype=jnp.float32)

    # Weight prep hoisted out of the jitted forward (param-init time).
    w_flat = prepare_weight(weight)

    fwd = jax.jit(conv2d_1x7_batchnorm)
    out = fwd(x, w_flat, gamma, beta)
    out = jax.block_until_ready(out)
    assert out.shape == (N, Cout, H, W)

    ref = _reference(x, weight, gamma, beta)
    err = float(jnp.max(jnp.abs(out - ref)))
    assert err < 0.1, f"max abs error vs reference too large: {err}"
    print("KERNEL_OK")
</pallas_src>

<mosaic_0001>
module attributes {stable_mosaic.version = 11 : i64} {
  func.func @_conv_bn_kernel(%arg0: i32, %arg1: memref<1120x256xbf16, #tpu.memory_space<vmem>>, %arg2: memref<192x1120xbf16, #tpu.memory_space<vmem>>, %arg3: memref<192x1xf32, #tpu.memory_space<vmem>>, %arg4: memref<192x1xf32, #tpu.memory_space<vmem>>, %arg5: memref<256x1xf32, #tpu.memory_space<vmem>>, %arg6: memref<192x256xf32, #tpu.memory_space<vmem>>) attributes {dimension_semantics = [#tpu.dimension_semantics<arbitrary>], iteration_bounds = array<i64: 1>, scalar_prefetch = 0 : i64, scratch_operands = 0 : i64, tpu.core_type = #tpu.core_type<tc>, window_params = [{pipeline_mode = #tpu.pipeline_mode<synchronous>, transform_indices = @transform_0, window_bounds = array<i64: 1120, 256>}, {pipeline_mode = #tpu.pipeline_mode<synchronous>, transform_indices = @transform_1, window_bounds = array<i64: 192, 1120>}, {pipeline_mode = #tpu.pipeline_mode<synchronous>, transform_indices = @transform_2, window_bounds = array<i64: 192, 1>}, {pipeline_mode = #tpu.pipeline_mode<synchronous>, transform_indices = @transform_3, window_bounds = array<i64: 192, 1>}, {pipeline_mode = #tpu.pipeline_mode<synchronous>, transform_indices = @transform_4, window_bounds = array<i64: 256, 1>}, {pipeline_mode = #tpu.pipeline_mode<synchronous>, transform_indices = @transform_5, window_bounds = array<i64: 192, 256>}]} {
    %c0 = arith.constant 0 : index
    %c0_0 = arith.constant 0 : index
    %0 = vector.load %arg2[%c0, %c0_0] : memref<192x1120xbf16, #tpu.memory_space<vmem>>, vector<192x1120xbf16>
    %c0_1 = arith.constant 0 : index
    %c0_2 = arith.constant 0 : index
    %1 = vector.load %arg1[%c0_1, %c0_2] : memref<1120x256xbf16, #tpu.memory_space<vmem>>, vector<1120x256xbf16>
    %cst = arith.constant dense<0.000000e+00> : vector<192x256xf32>
    %2 = tpu.matmul %0, %1, %cst {dimension_numbers = #tpu.dot_dimension_numbers<[1], [0], [0], [1], [0, 0, 1, 1], [], []>} : vector<192x1120xbf16>, vector<1120x256xbf16>, vector<192x256xf32> -> vector<192x256xf32>
    %c0_3 = arith.constant 0 : index
    %c0_4 = arith.constant 0 : index
    %3 = vector.load %arg5[%c0_3, %c0_4] : memref<256x1xf32, #tpu.memory_space<vmem>>, vector<256x1xf32>
    %cst_5 = arith.constant dense<0.000000e+00> : vector<192x1xf32>
    %4 = tpu.matmul %2, %3, %cst_5 {dimension_numbers = #tpu.dot_dimension_numbers<[1], [0], [0], [1], [0, 0, 1, 1], [], []>} : vector<192x256xf32>, vector<256x1xf32>, vector<192x1xf32> -> vector<192x1xf32>
    %5 = arith.mulf %2, %2 : vector<192x256xf32>
    %cst_6 = arith.constant dense<0.000000e+00> : vector<192x1xf32>
    %6 = tpu.matmul %5, %3, %cst_6 {dimension_numbers = #tpu.dot_dimension_numbers<[1], [0], [0], [1], [0, 0, 1, 1], [], []>} : vector<192x256xf32>, vector<256x1xf32>, vector<192x1xf32> -> vector<192x1xf32>
    %cst_7 = arith.constant 0.0069444445 : f32
    %7 = vector.broadcast %cst_7 : f32 to vector<192x1xf32>
    %8 = arith.mulf %4, %7 : vector<192x1xf32>
    %cst_8 = arith.constant 0.0069444445 : f32
    %9 = vector.broadcast %cst_8 : f32 to vector<192x1xf32>
    %10 = arith.mulf %6, %9 : vector<192x1xf32>
    %11 = arith.mulf %8, %8 : vector<192x1xf32>
    %12 = arith.subf %10, %11 : vector<192x1xf32>
    %cst_9 = arith.constant 0.000000e+00 : f32
    %13 = vector.broadcast %cst_9 : f32 to vector<192x1xf32>
    %14 = arith.maximumf %12, %13 : vector<192x1xf32>
    %cst_10 = arith.constant 1.000000e-03 : f32
    %15 = vector.broadcast %cst_10 : f32 to vector<192x1xf32>
    %16 = arith.addf %14, %15 : vector<192x1xf32>
    %17 = math.rsqrt %16 : vector<192x1xf32>
    %c0_11 = arith.constant 0 : index
    %c0_12 = arith.constant 0 : index
    %18 = vector.load %arg3[%c0_11, %c0_12] : memref<192x1xf32, #tpu.memory_space<vmem>>, vector<192x1xf32>
    %19 = arith.mulf %18, %17 : vector<192x1xf32>
    %c0_13 = arith.constant 0 : index
    %c0_14 = arith.constant 0 : index
    %20 = vector.load %arg4[%c0_13, %c0_14] : memref<192x1xf32, #tpu.memory_space<vmem>>, vector<192x1xf32>
    %21 = arith.mulf %8, %19 : vector<192x1xf32>
    %22 = arith.subf %20, %21 : vector<192x1xf32>
    %23 = vector.broadcast %19 : vector<192x1xf32> to vector<192x256xf32>
    %24 = arith.mulf %2, %23 : vector<192x256xf32>
    %25 = vector.broadcast %22 : vector<192x1xf32> to vector<192x256xf32>
    %26 = arith.addf %24, %25 : vector<192x256xf32>
    %c0_15 = arith.constant 0 : index
    %c0_16 = arith.constant 0 : index
    %27 = vector.load %arg6[%c0_15, %c0_16] : memref<192x256xf32, #tpu.memory_space<vmem>>, vector<192x256xf32>
    tpu.vector_store %arg6[%c0_15, %c0_16], %26 {strides = array<i32>} : memref<192x256xf32, #tpu.memory_space<vmem>>, vector<192x256xf32>,
    return
  }
  func.func @transform_0(%arg0: i32) -> (i32, i32) {
    %c0_i32 = arith.constant 0 : i32
    %c0_i32_0 = arith.constant 0 : i32
    %c0_i32_1 = arith.constant 0 : i32
    return %c0_i32, %c0_i32_0 : i32, i32
  }
  func.func @transform_1(%arg0: i32) -> (i32, i32) {
    %c0_i32 = arith.constant 0 : i32
    %c0_i32_0 = arith.constant 0 : i32
    %c0_i32_1 = arith.constant 0 : i32
    return %c0_i32, %c0_i32_0 : i32, i32
  }
  func.func @transform_2(%arg0: i32) -> (i32, i32) {
    %c0_i32 = arith.constant 0 : i32
    %c0_i32_0 = arith.constant 0 : i32
    %c0_i32_1 = arith.constant 0 : i32
    return %c0_i32, %c0_i32_0 : i32, i32
  }
  func.func @transform_3(%arg0: i32) -> (i32, i32) {
    %c0_i32 = arith.constant 0 : i32
    %c0_i32_0 = arith.constant 0 : i32
    %c0_i32_1 = arith.constant 0 : i32
    return %c0_i32, %c0_i32_0 : i32, i32
  }
  func.func @transform_4(%arg0: i32) -> (i32, i32) {
    %c0_i32 = arith.constant 0 : i32
    %c0_i32_0 = arith.constant 0 : i32
    %c0_i32_1 = arith.constant 0 : i32
    return %c0_i32, %c0_i32_0 : i32, i32
  }
  func.func @transform_5(%arg0: i32) -> (i32, i32) {
    %c0_i32 = arith.constant 0 : i32
    %c0_i32_0 = arith.constant 0 : i32
    %c0_i32_1 = arith.constant 0 : i32
    return %c0_i32, %c0_i32_0 : i32, i32
  }
}

</mosaic_0001>

<llo_original>
// kernel: conv2d_1x7_batchnorm.1
$region0: #{conv2d_1x7_batchnorm.1}
  #allocation0 [shape = 'u32[]', space=smem, size = 0x4, offset = 0x4, fixed_abs, tag = 'smem constant byte address 0x4 - core index']
  #allocation1 [shape = 'u32[144,128]{1,0:T(1,128)}', space=vmem, size = 0x12000, scoped, tag = 'internal scratch']
  %s0 = inlined_call_operand.vmem [shape: bf16[1120,256], index: 0, kind: input, shape index: {}]
  %s1 = inlined_call_operand.vmem [shape: bf16[192,1120], index: 1, kind: input, shape index: {}]
  %s2 = inlined_call_operand.vmem [shape: f32[192,1], index: 2, kind: input, shape index: {}]
  %s3 = inlined_call_operand.vmem [shape: f32[192,1], index: 3, kind: input, shape index: {}]
  %s4 = inlined_call_operand.vmem [shape: f32[256,1], index: 4, kind: input, shape index: {}]
  %s5 = inlined_call_operand.vmem [shape: f32[192,256], index: 5, kind: output, shape index: {}]
  %s6 = sld [smem:[#allocation0]]
  $region30: #{conv2d_1x7_batchnorm.1} parent=0
    _
  %s8 = ssub.s32 1, %s6
  %s9 = scalar_select 0, %s8, %s6
  // Predicated region
  $region2: #{conv2d_1x7_batchnorm.1} parent=0 // pred_check
    _
  $region3: #{conv2d_1x7_batchnorm.1} parent=0 // pred_check_branch
    %11 = sbr.rel (0) target = $region5
  $region4: #{conv2d_1x7_batchnorm.1} parent=0 // pred_region
    _
  $region5: #{conv2d_1x7_batchnorm.1} parent=0 // pred_fallthru
    _
  // Predicated region
  $region6: #{conv2d_1x7_batchnorm.1} parent=0 // pred_check
    _
  $region7: #{conv2d_1x7_batchnorm.1} parent=0 // pred_check_branch
    %13 = sbr.rel (0) target = $region9
  $region8: #{conv2d_1x7_batchnorm.1} parent=0 // pred_region
    _
  $region9: #{conv2d_1x7_batchnorm.1} parent=0 // pred_fallthru
    _
  // Predicated region
  $region10: #{conv2d_1x7_batchnorm.1} parent=0 // pred_check
    _
  $region11: #{conv2d_1x7_batchnorm.1} parent=0 // pred_check_branch
    %15 = sbr.rel (0) target = $region13
  $region12: #{conv2d_1x7_batchnorm.1} parent=0 // pred_region
    _
  $region13: #{conv2d_1x7_batchnorm.1} parent=0 // pred_fallthru
    _
  // Predicated region
  $region14: #{conv2d_1x7_batchnorm.1} parent=0 // pred_check
    _
  $region15: #{conv2d_1x7_batchnorm.1} parent=0 // pred_check_branch
    %17 = sbr.rel (0) target = $region17
  $region16: #{conv2d_1x7_batchnorm.1} parent=0 // pred_region
    _
  $region17: #{conv2d_1x7_batchnorm.1} parent=0 // pred_fallthru
    _
  // Predicated region
  $region18: #{conv2d_1x7_batchnorm.1} parent=0 // pred_check
    _
  $region19: #{conv2d_1x7_batchnorm.1} parent=0 // pred_check_branch
    %19 = sbr.rel (0) target = $region21
  $region20: #{conv2d_1x7_batchnorm.1} parent=0 // pred_region
    _
  $region21: #{conv2d_1x7_batchnorm.1} parent=0 // pred_fallthru
    _
  %v21 = vld [vmem:[%s1] sm:$0xff]
  %v22 = vld [vmem:[%s1 + $0x8] sm:$0xff]
  %v23 = vld [vmem:[%s1 + $0x10] sm:$0xff]
  %v24 = vld [vmem:[%s1 + $0x18] sm:$0xff]
  %v25 = vld [vmem:[%s1 + $0x20] sm:$0xf]
  %v26 = vld [vmem:[%s1 + $0x24] sm:$0xff]
  %v27 = vld [vmem:[%s1 + $0x2c] sm:$0xff]
  %v28 = vld [vmem:[%s1 + $0x34] sm:$0xff]
  %v29 = vld [vmem:[%s1 + $0x3c] sm:$0xff]
  %v30 = vld [vmem:[%s1 + $0x44] sm:$0xf]
  %v31 = vld [vmem:[%s1 + $0x48] sm:$0xff]
  %v32 = vld [vmem:[%s1 + $0x50] sm:$0xff]
  %v33 = vld [vmem:[%s1 + $0x58] sm:$0xff]
  %v34 = vld [vmem:[%s1 + $0x60] sm:$0xff]
  %v35 = vld [vmem:[%s1 + $0x68] sm:$0xf]
  %v36 = vld [vmem:[%s1 + $0x6c] sm:$0xff]
  %v37 = vld [vmem:[%s1 + $0x74] sm:$0xff]
  %v38 = vld [vmem:[%s1 + $0x7c] sm:$0xff]
  %v39 = vld [vmem:[%s1 + $0x84] sm:$0xff]
  %v40 = vld [vmem:[%s1 + $0x8c] sm:$0xf]
  %v41 = vld [vmem:[%s1 + $0x90] sm:$0xff]
  %v42 = vld [vmem:[%s1 + $0x98] sm:$0xff]
  %v43 = vld [vmem:[%s1 + $0xa0] sm:$0xff]
  %v44 = vld [vmem:[%s1 + $0xa8] sm:$0xff]
  %v45 = vld [vmem:[%s1 + $0xb0] sm:$0xf]
  %v46 = vld [vmem:[%s1 + $0xb4] sm:$0xff]
  %v47 = vld [vmem:[%s1 + $0xbc] sm:$0xff]
  %v48 = vld [vmem:[%s1 + $0xc4] sm:$0xff]
  %v49 = vld [vmem:[%s1 + $0xcc] sm:$0xff]
  %v50 = vld [vmem:[%s1 + $0xd4] sm:$0xf]
  %v51 = vld [vmem:[%s1 + $0xd8] sm:$0xff]
  %v52 = vld [vmem:[%s1 + $0xe0] sm:$0xff]
  %v53 = vld [vmem:[%s1 + $0xe8] sm:$0xff]
  %v54 = vld [vmem:[%s1 + $0xf0] sm:$0xff]
  %v55 = vld [vmem:[%s1 + $0xf8] sm:$0xf]
  %v56 = vld [vmem:[%s1 + $0xfc] sm:$0xff]
  %v57 = vld [vmem:[%s1 + $0x104] sm:$0xff]
  %v58 = vld [vmem:[%s1 + $0x10c] sm:$0xff]
  %v59 = vld [vmem:[%s1 + $0x114] sm:$0xff]
  %v60 = vld [vmem:[%s1 + $0x11c] sm:$0xf]
  %v61 = vld [vmem:[%s1 + $0x120] sm:$0xff]
  %v62 = vld [vmem:[%s1 + $0x128] sm:$0xff]
  %v63 = vld [vmem:[%s1 + $0x130] sm:$0xff]
  %v64 = vld [vmem:[%s1 + $0x138] sm:$0xff]
  %v65 = vld [vmem:[%s1 + $0x140] sm:$0xf]
  %v66 = vld [vmem:[%s1 + $0x144] sm:$0xff]
  %v67 = vld [vmem:[%s1 + $0x14c] sm:$0xff]
  %v68 = vld [vmem:[%s1 + $0x154] sm:$0xff]
  %v69 = vld [vmem:[%s1 + $0x15c] sm:$0xff]
  %v70 = vld [vmem:[%s1 + $0x164] sm:$0xf]
  %v71 = vld [vmem:[%s1 + $0x168] sm:$0xff]
  %v72 = vld [vmem:[%s1 + $0x170] sm:$0xff]
  %v73 = vld [vmem:[%s1 + $0x178] sm:$0xff]
  %v74 = vld [vmem:[%s1 + $0x180] sm:$0xff]
  %v75 = vld [vmem:[%s1 + $0x188] sm:$0xf]
  %v76 = vld [vmem:[%s1 + $0x18c] sm:$0xff]
  %v77 = vld [vmem:[%s1 + $0x194] sm:$0xff]
  %v78 = vld [vmem:[%s1 + $0x19c] sm:$0xff]
  %v79 = vld [vmem:[%s1 + $0x1a4] sm:$0xff]
  %v80 = vld [vmem:[%s1 + $0x1ac] sm:$0xf]
  %v81 = vld [vmem:[%s1 + $0x1b0] sm:$0xff]
  %v82 = vld [vmem:[%s1 + $0x1b8] sm:$0xff]
  %v83 = vld [vmem:[%s1 + $0x1c0] sm:$0xff]
  %v84 = vld [vmem:[%s1 + $0x1c8] sm:$0xff]
  %v85 = vld [vmem:[%s1 + $0x1d0] sm:$0xf]
  %v86 = vld [vmem:[%s1 + $0x1d4] sm:$0xff]
  %v87 = vld [vmem:[%s1 + $0x1dc] sm:$0xff]
  %v88 = vld [vmem:[%s1 + $0x1e4] sm:$0xff]
  %v89 = vld [vmem:[%s1 + $0x1ec] sm:$0xff]
  %v90 = vld [vmem:[%s1 + $0x1f4] sm:$0xf]
  %v91 = vld [vmem:[%s1 + $0x1f8] sm:$0xff]
  %v92 = vld [vmem:[%s1 + $0x200] sm:$0xff]
  %v93 = vld [vmem:[%s1 + $0x208] sm:$0xff]
  %v94 = vld [vmem:[%s1 + $0x210] sm:$0xff]
  %v95 = vld [vmem:[%s1 + $0x218] sm:$0xf]
  %v96 = vld [vmem:[%s1 + $0x21c] sm:$0xff]
  %v97 = vld [vmem:[%s1 + $0x224] sm:$0xff]
  %v98 = vld [vmem:[%s1 + $0x22c] sm:$0xff]
  %v99 = vld [vmem:[%s1 + $0x234] sm:$0xff]
  %v100 = vld [vmem:[%s1 + $0x23c] sm:$0xf]
  %v101 = vld [vmem:[%s1 + $0x240] sm:$0xff]
  %v102 = vld [vmem:[%s1 + $0x248] sm:$0xff]
  %v103 = vld [vmem:[%s1 + $0x250] sm:$0xff]
  %v104 = vld [vmem:[%s1 + $0x258] sm:$0xff]
  %v105 = vld [vmem:[%s1 + $0x260] sm:$0xf]
  %v106 = vld [vmem:[%s1 + $0x264] sm:$0xff]
  %v107 = vld [vmem:[%s1 + $0x26c] sm:$0xff]
  %v108 = vld [vmem:[%s1 + $0x274] sm:$0xff]
  %v109 = vld [vmem:[%s1 + $0x27c] sm:$0xff]
  %v110 = vld [vmem:[%s1 + $0x284] sm:$0xf]
  %v111 = vld [vmem:[%s1 + $0x288] sm:$0xff]
  %v112 = vld [vmem:[%s1 + $0x290] sm:$0xff]
  %v113 = vld [vmem:[%s1 + $0x298] sm:$0xff]
  %v114 = vld [vmem:[%s1 + $0x2a0] sm:$0xff]
  %v115 = vld [vmem:[%s1 + $0x2a8] sm:$0xf]
  %v116 = vld [vmem:[%s1 + $0x2ac] sm:$0xff]
  %v117 = vld [vmem:[%s1 + $0x2b4] sm:$0xff]
  %v118 = vld [vmem:[%s1 + $0x2bc] sm:$0xff]
  %v119 = vld [vmem:[%s1 + $0x2c4] sm:$0xff]
  %v120 = vld [vmem:[%s1 + $0x2cc] sm:$0xf]
  %v121 = vld [vmem:[%s1 + $0x2d0] sm:$0xff]
  %v122 = vld [vmem:[%s1 + $0x2d8] sm:$0xff]
  %v123 = vld [vmem:[%s1 + $0x2e0] sm:$0xff]
  %v124 = vld [vmem:[%s1 + $0x2e8] sm:$0xff]
  %v125 = vld [vmem:[%s1 + $0x2f0] sm:$0xf]
  %v126 = vld [vmem:[%s1 + $0x2f4] sm:$0xff]
  %v127 = vld [vmem:[%s1 + $0x2fc] sm:$0xff]
  %v128 = vld [vmem:[%s1 + $0x304] sm:$0xff]
  %v129 = vld [vmem:[%s1 + $0x30c] sm:$0xff]
  %v130 = vld [vmem:[%s1 + $0x314] sm:$0xf]
  %v131 = vld [vmem:[%s1 + $0x318] sm:$0xff]
  %v132 = vld [vmem:[%s1 + $0x320] sm:$0xff]
  %v133 = vld [vmem:[%s1 + $0x328] sm:$0xff]
  %v134 = vld [vmem:[%s1 + $0x330] sm:$0xff]
  %v135 = vld [vmem:[%s1 + $0x338] sm:$0xf]
  %v136 = vld [vmem:[%s1 + $0x33c] sm:$0xff]
  %v137 = vld [vmem:[%s1 + $0x344] sm:$0xff]
  %v138 = vld [vmem:[%s1 + $0x34c] sm:$0xff]
  %v139 = vld [vmem:[%s1 + $0x354] sm:$0xff]
  %v140 = vld [vmem:[%s1 + $0x35c] sm:$0xf]
  %v141 = vld [vmem:[%s0] sm:$0xff]
  %v142 = vld [vmem:[%s0 + $0x8] sm:$0xff]
  %v143 = vld [vmem:[%s0 + $0x10] sm:$0xff]
  %v144 = vld [vmem:[%s0 + $0x18] sm:$0xff]
  %v145 = vld [vmem:[%s0 + $0x20] sm:$0xff]
  %v146 = vld [vmem:[%s0 + $0x28] sm:$0xff]
  %v147 = vld [vmem:[%s0 + $0x30] sm:$0xff]
  %v148 = vld [vmem:[%s0 + $0x38] sm:$0xff]
  %v149 = vld [vmem:[%s0 + $0x40] sm:$0xff]
  %v150 = vld [vmem:[%s0 + $0x48] sm:$0xff]
  %v151 = vld [vmem:[%s0 + $0x50] sm:$0xff]
  %v152 = vld [vmem:[%s0 + $0x58] sm:$0xff]
  %v153 = vld [vmem:[%s0 + $0x60] sm:$0xff]
  %v154 = vld [vmem:[%s0 + $0x68] sm:$0xff]
  %v155 = vld [vmem:[%s0 + $0x70] sm:$0xff]
  %v156 = vld [vmem:[%s0 + $0x78] sm:$0xff]
  %v157 = vld [vmem:[%s0 + $0x80] sm:$0xff]
  %v158 = vld [vmem:[%s0 + $0x88] sm:$0xff]
  %v159 = vld [vmem:[%s0 + $0x90] sm:$0xff]
  %v160 = vld [vmem:[%s0 + $0x98] sm:$0xff]
  %v161 = vld [vmem:[%s0 + $0xa0] sm:$0xff]
  %v162 = vld [vmem:[%s0 + $0xa8] sm:$0xff]
  %v163 = vld [vmem:[%s0 + $0xb0] sm:$0xff]
  %v164 = vld [vmem:[%s0 + $0xb8] sm:$0xff]
  %v165 = vld [vmem:[%s0 + $0xc0] sm:$0xff]
  %v166 = vld [vmem:[%s0 + $0xc8] sm:$0xff]
  %v167 = vld [vmem:[%s0 + $0xd0] sm:$0xff]
  %v168 = vld [vmem:[%s0 + $0xd8] sm:$0xff]
  %v169 = vld [vmem:[%s0 + $0xe0] sm:$0xff]
  %v170 = vld [vmem:[%s0 + $0xe8] sm:$0xff]
  %v171 = vld [vmem:[%s0 + $0xf0] sm:$0xff]
  %v172 = vld [vmem:[%s0 + $0xf8] sm:$0xff]
  %v173 = vld [vmem:[%s0 + $0x100] sm:$0xff]
  %v174 = vld [vmem:[%s0 + $0x108] sm:$0xff]
  %v175 = vld [vmem:[%s0 + $0x110] sm:$0xff]
  %v176 = vld [vmem:[%s0 + $0x118] sm:$0xff]
  %v177 = vld [vmem:[%s0 + $0x120] sm:$0xff]
  %v178 = vld [vmem:[%s0 + $0x128] sm:$0xff]
  %v179 = vld [vmem:[%s0 + $0x130] sm:$0xff]
  %v180 = vld [vmem:[%s0 + $0x138] sm:$0xff]
  %v181 = vld [vmem:[%s0 + $0x140] sm:$0xff]
  %v182 = vld [vmem:[%s0 + $0x148] sm:$0xff]
  %v183 = vld [vmem:[%s0 + $0x150] sm:$0xff]
  %v184 = vld [vmem:[%s0 + $0x158] sm:$0xff]
  %v185 = vld [vmem:[%s0 + $0x160] sm:$0xff]
  %v186 = vld [vmem:[%s0 + $0x168] sm:$0xff]
  %v187 = vld [vmem:[%s0 + $0x170] sm:$0xff]
  %v188 = vld [vmem:[%s0 + $0x178] sm:$0xff]
  %v189 = vld [vmem:[%s0 + $0x180] sm:$0xff]
  %v190 = vld [vmem:[%s0 + $0x188] sm:$0xff]
  %v191 = vld [vmem:[%s0 + $0x190] sm:$0xff]
  %v192 = vld [vmem:[%s0 + $0x198] sm:$0xff]
  %v193 = vld [vmem:[%s0 + $0x1a0] sm:$0xff]
  %v194 = vld [vmem:[%s0 + $0x1a8] sm:$0xff]
  %v195 = vld [vmem:[%s0 + $0x1b0] sm:$0xff]
  %v196 = vld [vmem:[%s0 + $0x1b8] sm:$0xff]
  %v197 = vld [vmem:[%s0 + $0x1c0] sm:$0xff]
  %v198 = vld [vmem:[%s0 + $0x1c8] sm:$0xff]
  %v199 = vld [vmem:[%s0 + $0x1d0] sm:$0xff]
  %v200 = vld [vmem:[%s0 + $0x1d8] sm:$0xff]
  %v201 = vld [vmem:[%s0 + $0x1e0] sm:$0xff]
  %v202 = vld [vmem:[%s0 + $0x1e8] sm:$0xff]
  %v203 = vld [vmem:[%s0 + $0x1f0] sm:$0xff]
  %v204 = vld [vmem:[%s0 + $0x1f8] sm:$0xff]
  %v205 = vld [vmem:[%s0 + $0x200] sm:$0xff]
  %v206 = vld [vmem:[%s0 + $0x208] sm:$0xff]
  %v207 = vld [vmem:[%s0 + $0x210] sm:$0xff]
  %v208 = vld [vmem:[%s0 + $0x218] sm:$0xff]
  %v209 = vld [vmem:[%s0 + $0x220] sm:$0xff]
  %v210 = vld [vmem:[%s0 + $0x228] sm:$0xff]
  %v211 = vld [vmem:[%s0 + $0x230] sm:$0xff]
  %v212 = vld [vmem:[%s0 + $0x238] sm:$0xff]
  %v213 = vld [vmem:[%s0 + $0x240] sm:$0xff]
  %v214 = vld [vmem:[%s0 + $0x248] sm:$0xff]
  %v215 = vld [vmem:[%s0 + $0x250] sm:$0xff]
  %v216 = vld [vmem:[%s0 + $0x258] sm:$0xff]
  %v217 = vld [vmem:[%s0 + $0x260] sm:$0xff]
  %v218 = vld [vmem:[%s0 + $0x268] sm:$0xff]
  %v219 = vld [vmem:[%s0 + $0x270] sm:$0xff]
  %v220 = vld [vmem:[%s0 + $0x278] sm:$0xff]
  %v221 = vld [vmem:[%s0 + $0x280] sm:$0xff]
  %v222 = vld [vmem:[%s0 + $0x288] sm:$0xff]
  %v223 = vld [vmem:[%s0 + $0x290] sm:$0xff]
  %v224 = vld [vmem:[%s0 + $0x298] sm:$0xff]
  %v225 = vld [vmem:[%s0 + $0x2a0] sm:$0xff]
  %v226 = vld [vmem:[%s0 + $0x2a8] sm:$0xff]
  %v227 = vld [vmem:[%s0 + $0x2b0] sm:$0xff]
  %v228 = vld [vmem:[%s0 + $0x2b8] sm:$0xff]
  %v229 = vld [vmem:[%s0 + $0x2c0] sm:$0xff]
  %v230 = vld [vmem:[%s0 + $0x2c8] sm:$0xff]
  %v231 = vld [vmem:[%s0 + $0x2d0] sm:$0xff]
  %v232 = vld [vmem:[%s0 + $0x2d8] sm:$0xff]
  %v233 = vld [vmem:[%s0 + $0x2e0] sm:$0xff]
  %v234 = vld [vmem:[%s0 + $0x2e8] sm:$0xff]
  %v235 = vld [vmem:[%s0 + $0x2f0] sm:$0xff]
  %v236 = vld [vmem:[%s0 + $0x2f8] sm:$0xff]
  %v237 = vld [vmem:[%s0 + $0x300] sm:$0xff]
  %v238 = vld [vmem:[%s0 + $0x308] sm:$0xff]
  %v239 = vld [vmem:[%s0 + $0x310] sm:$0xff]
  %v240 = vld [vmem:[%s0 + $0x318] sm:$0xff]
  %v241 = vld [vmem:[%s0 + $0x320] sm:$0xff]
  %v242 = vld [vmem:[%s0 + $0x328] sm:$0xff]
  %v243 = vld [vmem:[%s0 + $0x330] sm:$0xff]
  %v244 = vld [vmem:[%s0 + $0x338] sm:$0xff]
  %v245 = vld [vmem:[%s0 + $0x340] sm:$0xff]
  %v246 = vld [vmem:[%s0 + $0x348] sm:$0xff]
  %v247 = vld [vmem:[%s0 + $0x350] sm:$0xff]
  %v248 = vld [vmem:[%s0 + $0x358] sm:$0xff]
  %v249 = vld [vmem:[%s0 + $0x360] sm:$0xff]
  %v250 = vld [vmem:[%s0 + $0x368] sm:$0xff]
  %v251 = vld [vmem:[%s0 + $0x370] sm:$0xff]
  %v252 = vld [vmem:[%s0 + $0x378] sm:$0xff]
  %v253 = vld [vmem:[%s0 + $0x380] sm:$0xff]
  %v254 = vld [vmem:[%s0 + $0x388] sm:$0xff]
  %v255 = vld [vmem:[%s0 + $0x390] sm:$0xff]
  %v256 = vld [vmem:[%s0 + $0x398] sm:$0xff]
  %v257 = vld [vmem:[%s0 + $0x3a0] sm:$0xff]
  %v258 = vld [vmem:[%s0 + $0x3a8] sm:$0xff]
  %v259 = vld [vmem:[%s0 + $0x3b0] sm:$0xff]
  %v260 = vld [vmem:[%s0 + $0x3b8] sm:$0xff]
  %v261 = vld [vmem:[%s0 + $0x3c0] sm:$0xff]
  %v262 = vld [vmem:[%s0 + $0x3c8] sm:$0xff]
  %v263 = vld [vmem:[%s0 + $0x3d0] sm:$0xff]
  %v264 = vld [vmem:[%s0 + $0x3d8] sm:$0xff]
  %v265 = vld [vmem:[%s0 + $0x3e0] sm:$0xff]
  %v266 = vld [vmem:[%s0 + $0x3e8] sm:$0xff]
  %v267 = vld [vmem:[%s0 + $0x3f0] sm:$0xff]
  %v268 = vld [vmem:[%s0 + $0x3f8] sm:$0xff]
  %v269 = vld [vmem:[%s0 + $0x400] sm:$0xff]
  %v270 = vld [vmem:[%s0 + $0x408] sm:$0xff]
  %v271 = vld [vmem:[%s0 + $0x410] sm:$0xff]
  %v272 = vld [vmem:[%s0 + $0x418] sm:$0xff]
  %v273 = vld [vmem:[%s0 + $0x420] sm:$0xff]
  %v274 = vld [vmem:[%s0 + $0x428] sm:$0xff]
  %v275 = vld [vmem:[%s0 + $0x430] sm:$0xff]
  %v276 = vld [vmem:[%s0 + $0x438] sm:$0xff]
  %v277 = vld [vmem:[%s0 + $0x440] sm:$0xff]
  %v278 = vld [vmem:[%s0 + $0x448] sm:$0xff]
  %v279 = vld [vmem:[%s0 + $0x450] sm:$0xff]
  %v280 = vld [vmem:[%s0 + $0x458] sm:$0xff]
  %v401 = vunpack.c.l.b16 %v21
  %v402 = vunpack.c.h.b16 %v21
  %v403 = vunpack.c.l.b16 %v22
  %v404 = vunpack.c.h.b16 %v22
  %v405 = vunpack.c.l.b16 %v23
  %v406 = vunpack.c.h.b16 %v23
  %v407 = vunpack.c.l.b16 %v24
  %v408 = vunpack.c.h.b16 %v24
  %v409 = vunpack.c.l.b16 %v25
  %v410 = vunpack.c.l.b16 %v26
  %v411 = vunpack.c.h.b16 %v26
  %v412 = vunpack.c.l.b16 %v27
  %v413 = vunpack.c.h.b16 %v27
  %v414 = vunpack.c.l.b16 %v28
  %v415 = vunpack.c.h.b16 %v28
  %v416 = vunpack.c.l.b16 %v29
  %v417 = vunpack.c.h.b16 %v29
  %v418 = vunpack.c.l.b16 %v30
  %v419 = vunpack.c.l.b16 %v31
  %v420 = vunpack.c.h.b16 %v31
  %v421 = vunpack.c.l.b16 %v32
  %v422 = vunpack.c.h.b16 %v32
  %v423 = vunpack.c.l.b16 %v33
  %v424 = vunpack.c.h.b16 %v33
  %v425 = vunpack.c.l.b16 %v34
  %v426 = vunpack.c.h.b16 %v34
  %v427 = vunpack.c.l.b16 %v35
  %v428 = vunpack.c.l.b16 %v36
  %v429 = vunpack.c.h.b16 %v36
  %v430 = vunpack.c.l.b16 %v37
  %v431 = vunpack.c.h.b16 %v37
  %v432 = vunpack.c.l.b16 %v38
  %v433 = vunpack.c.h.b16 %v38
  %v434 = vunpack.c.l.b16 %v39
  %v435 = vunpack.c.h.b16 %v39
  %v436 = vunpack.c.l.b16 %v40
  %v437 = vunpack.c.l.b16 %v41
  %v438 = vunpack.c.h.b16 %v41
  %v439 = vunpack.c.l.b16 %v42
  %v440 = vunpack.c.h.b16 %v42
  %v441 = vunpack.c.l.b16 %v43
  %v442 = vunpack.c.h.b16 %v43
  %v443 = vunpack.c.l.b16 %v44
  %v444 = vunpack.c.h.b16 %v44
  %v445 = vunpack.c.l.b16 %v45
  %v446 = vunpack.c.l.b16 %v46
  %v447 = vunpack.c.h.b16 %v46
  %v448 = vunpack.c.l.b16 %v47
  %v449 = vunpack.c.h.b16 %v47
  %v450 = vunpack.c.l.b16 %v48
  %v451 = vunpack.c.h.b16 %v48
  %v452 = vunpack.c.l.b16 %v49
  %v453 = vunpack.c.h.b16 %v49
  %v454 = vunpack.c.l.b16 %v50
  %v455 = vunpack.c.l.b16 %v51
  %v456 = vunpack.c.h.b16 %v51
  %v457 = vunpack.c.l.b16 %v52
  %v458 = vunpack.c.h.b16 %v52
  %v459 = vunpack.c.l.b16 %v53
  %v460 = vunpack.c.h.b16 %v53
  %v461 = vunpack.c.l.b16 %v54
  %v462 = vunpack.c.h.b16 %v54
  %v463 = vunpack.c.l.b16 %v55
  %v464 = vunpack.c.l.b16 %v56
  %v465 = vunpack.c.h.b16 %v56
  %v466 = vunpack.c.l.b16 %v57
  %v467 = vunpack.c.h.b16 %v57
  %v468 = vunpack.c.l.b16 %v58
  %v469 = vunpack.c.h.b16 %v58
  %v470 = vunpack.c.l.b16 %v59
  %v471 = vunpack.c.h.b16 %v59
  %v472 = vunpack.c.l.b16 %v60
  %v473 = vunpack.c.l.b16 %v61
  %v474 = vunpack.c.h.b16 %v61
  %v475 = vunpack.c.l.b16 %v62
  %v476 = vunpack.c.h.b16 %v62
  %v477 = vunpack.c.l.b16 %v63
  %v478 = vunpack.c.h.b16 %v63
  %v479 = vunpack.c.l.b16 %v64
  %v480 = vunpack.c.h.b16 %v64
  %v481 = vunpack.c.l.b16 %v65
  %v482 = vunpack.c.l.b16 %v66
  %v483 = vunpack.c.h.b16 %v66
  %v484 = vunpack.c.l.b16 %v67
  %v485 = vunpack.c.h.b16 %v67
  %v486 = vunpack.c.l.b16 %v68
  %v487 = vunpack.c.h.b16 %v68
  %v488 = vunpack.c.l.b16 %v69
  %v489 = vunpack.c.h.b16 %v69
  %v490 = vunpack.c.l.b16 %v70
  %v491 = vunpack.c.l.b16 %v71
  %v492 = vunpack.c.h.b16 %v71
  %v493 = vunpack.c.l.b16 %v72
  %v494 = vunpack.c.h.b16 %v72
  %v495 = vunpack.c.l.b16 %v73
  %v496 = vunpack.c.h.b16 %v73
  %v497 = vunpack.c.l.b16 %v74
  %v498 = vunpack.c.h.b16 %v74
  %v499 = vunpack.c.l.b16 %v75
  %v500 = vunpack.c.l.b16 %v76
  %v501 = vunpack.c.h.b16 %v76
  %v502 = vunpack.c.l.b16 %v77
  %v503 = vunpack.c.h.b16 %v77
  %v504 = vunpack.c.l.b16 %v78
  %v505 = vunpack.c.h.b16 %v78
  %v506 = vunpack.c.l.b16 %v79
  %v507 = vunpack.c.h.b16 %v79
  %v508 = vunpack.c.l.b16 %v80
  %v509 = vunpack.c.l.b16 %v81
  %v510 = vunpack.c.h.b16 %v81
  %v511 = vunpack.c.l.b16 %v82
  %v512 = vunpack.c.h.b16 %v82
  %v513 = vunpack.c.l.b16 %v83
  %v514 = vunpack.c.h.b16 %v83
  %v515 = vunpack.c.l.b16 %v84
  %v516 = vunpack.c.h.b16 %v84
  %v517 = vunpack.c.l.b16 %v85
  %v518 = vunpack.c.l.b16 %v86
  %v519 = vunpack.c.h.b16 %v86
  %v520 = vunpack.c.l.b16 %v87
  %v521 = vunpack.c.h.b16 %v87
  %v522 = vunpack.c.l.b16 %v88
  %v523 = vunpack.c.h.b16 %v88
  %v524 = vunpack.c.l.b16 %v89
  %v525 = vunpack.c.h.b16 %v89
  %v526 = vunpack.c.l.b16 %v90
  %v527 = vunpack.c.l.b16 %v91
  %v528 = vunpack.c.h.b16 %v91
  %v529 = vunpack.c.l.b16 %v92
  %v530 = vunpack.c.h.b16 %v92
  %v531 = vunpack.c.l.b16 %v93
  %v532 = vunpack.c.h.b16 %v93
  %v533 = vunpack.c.l.b16 %v94
  %v534 = vunpack.c.h.b16 %v94
  %v535 = vunpack.c.l.b16 %v95
  %v536 = vunpack.c.l.b16 %v96
  %v537 = vunpack.c.h.b16 %v96
  %v538 = vunpack.c.l.b16 %v97
  %v539 = vunpack.c.h.b16 %v97
  %v540 = vunpack.c.l.b16 %v98
  %v541 = vunpack.c.h.b16 %v98
  %v542 = vunpack.c.l.b16 %v99
  %v543 = vunpack.c.h.b16 %v99
  %v544 = vunpack.c.l.b16 %v100
  %v545 = vunpack.c.l.b16 %v101
  %v546 = vunpack.c.h.b16 %v101
  %v547 = vunpack.c.l.b16 %v102
  %v548 = vunpack.c.h.b16 %v102
  %v549 = vunpack.c.l.b16 %v103
  %v550 = vunpack.c.h.b16 %v103
  %v551 = vunpack.c.l.b16 %v104
  %v552 = vunpack.c.h.b16 %v104
  %v553 = vunpack.c.l.b16 %v105
  %v554 = vunpack.c.l.b16 %v106
  %v555 = vunpack.c.h.b16 %v106
  %v556 = vunpack.c.l.b16 %v107
  %v557 = vunpack.c.h.b16 %v107
  %v558 = vunpack.c.l.b16 %v108
  %v559 = vunpack.c.h.b16 %v108
  %v560 = vunpack.c.l.b16 %v109
  %v561 = vunpack.c.h.b16 %v109
  %v562 = vunpack.c.l.b16 %v110
  %v563 = vunpack.c.l.b16 %v111
  %v564 = vunpack.c.h.b16 %v111
  %v565 = vunpack.c.l.b16 %v112
  %v566 = vunpack.c.h.b16 %v112
  %v567 = vunpack.c.l.b16 %v113
  %v568 = vunpack.c.h.b16 %v113
  %v569 = vunpack.c.l.b16 %v114
  %v570 = vunpack.c.h.b16 %v114
  %v571 = vunpack.c.l.b16 %v115
  %v572 = vunpack.c.l.b16 %v116
  %v573 = vunpack.c.h.b16 %v116
  %v574 = vunpack.c.l.b16 %v117
  %v575 = vunpack.c.h.b16 %v117
  %v576 = vunpack.c.l.b16 %v118
  %v577 = vunpack.c.h.b16 %v118
  %v578 = vunpack.c.l.b16 %v119
  %v579 = vunpack.c.h.b16 %v119
  %v580 = vunpack.c.l.b16 %v120
  %v581 = vunpack.c.l.b16 %v121
  %v582 = vunpack.c.h.b16 %v121
  %v583 = vunpack.c.l.b16 %v122
  %v584 = vunpack.c.h.b16 %v122
  %v585 = vunpack.c.l.b16 %v123
  %v586 = vunpack.c.h.b16 %v123
  %v587 = vunpack.c.l.b16 %v124
  %v588 = vunpack.c.h.b16 %v124
  %v589 = vunpack.c.l.b16 %v125
  %v590 = vunpack.c.l.b16 %v126
  %v591 = vunpack.c.h.b16 %v126
  %v592 = vunpack.c.l.b16 %v127
  %v593 = vunpack.c.h.b16 %v127
  %v594 = vunpack.c.l.b16 %v128
  %v595 = vunpack.c.h.b16 %v128
  %v596 = vunpack.c.l.b16 %v129
  %v597 = vunpack.c.h.b16 %v129
  %v598 = vunpack.c.l.b16 %v130
  %v599 = vunpack.c.l.b16 %v131
  %v600 = vunpack.c.h.b16 %v131
  %v601 = vunpack.c.l.b16 %v132
  %v602 = vunpack.c.h.b16 %v132
  %v603 = vunpack.c.l.b16 %v133
  %v604 = vunpack.c.h.b16 %v133
  %v605 = vunpack.c.l.b16 %v134
  %v606 = vunpack.c.h.b16 %v134
  %v607 = vunpack.c.l.b16 %v135
  %v608 = vunpack.c.l.b16 %v136
  %v609 = vunpack.c.h.b16 %v136
  %v610 = vunpack.c.l.b16 %v137
  %v611 = vunpack.c.h.b16 %v137
  %v612 = vunpack.c.l.b16 %v138
  %v613 = vunpack.c.h.b16 %v138
  %v614 = vunpack.c.l.b16 %v139
  %v615 = vunpack.c.h.b16 %v139
  %v616 = vunpack.c.l.b16 %v140
  %v617 = vpack.c.b16 %v410, %v401
  %v618 = vpack.c.b16 %v411, %v402
  %v619 = vpack.c.b16 %v412, %v403
  %v620 = vpack.c.b16 %v413, %v404
  %v621 = vpack.c.b16 %v414, %v405
  %v622 = vpack.c.b16 %v415, %v406
  %v623 = vpack.c.b16 %v416, %v407
  %v624 = vpack.c.b16 %v417, %v408
  %v625 = vpack.c.b16 %v418, %v409
  %v626 = vpack.c.b16 %v428, %v419
  %v627 = vpack.c.b16 %v429, %v420
  %v628 = vpack.c.b16 %v430, %v421
  %v629 = vpack.c.b16 %v431, %v422
  %v630 = vpack.c.b16 %v432, %v423
  %v631 = vpack.c.b16 %v433, %v424
  %v632 = vpack.c.b16 %v434, %v425
  %v633 = vpack.c.b16 %v435, %v426
  %v634 = vpack.c.b16 %v436, %v427
  %v635 = vpack.c.b16 %v446, %v437
  %v636 = vpack.c.b16 %v447, %v438
  %v637 = vpack.c.b16 %v448, %v439
  %v638 = vpack.c.b16 %v449, %v440
  %v639 = vpack.c.b16 %v450, %v441
  %v640 = vpack.c.b16 %v451, %v442
  %v641 = vpack.c.b16 %v452, %v443
  %v642 = vpack.c.b16 %v453, %v444
  %v643 = vpack.c.b16 %v454, %v445
  %v644 = vpack.c.b16 %v464, %v455
  %v645 = vpack.c.b16 %v465, %v456
  %v646 = vpack.c.b16 %v466, %v457
  %v647 = vpack.c.b16 %v467, %v458
  %v648 = vpack.c.b16 %v468, %v459
  %v649 = vpack.c.b16 %v469, %v460
  %v650 = vpack.c.b16 %v470, %v461
  %v651 = vpack.c.b16 %v471, %v462
  %v652 = vpack.c.b16 %v472, %v463
  %v653 = vpack.c.b16 %v482, %v473
  %v654 = vpack.c.b16 %v483, %v474
  %v655 = vpack.c.b16 %v484, %v475
  %v656 = vpack.c.b16 %v485, %v476
  %v657 = vpack.c.b16 %v486, %v477
  %v658 = vpack.c.b16 %v487, %v478
  %v659 = vpack.c.b16 %v488, %v479
  %v660 = vpack.c.b16 %v489, %v480
  %v661 = vpack.c.b16 %v490, %v481
  %v662 = vpack.c.b16 %v500, %v491
  %v663 = vpack.c.b16 %v501, %v492
  %v664 = vpack.c.b16 %v502, %v493
  %v665 = vpack.c.b16 %v503, %v494
  %v666 = vpack.c.b16 %v504, %v495
  %v667 = vpack.c.b16 %v505, %v496
  %v668 = vpack.c.b16 %v506, %v497
  %v669 = vpack.c.b16 %v507, %v498
  %v670 = vpack.c.b16 %v508, %v499
  %v671 = vpack.c.b16 %v518, %v509
  %v672 = vpack.c.b16 %v519, %v510
  %v673 = vpack.c.b16 %v520, %v511
  %v674 = vpack.c.b16 %v521, %v512
  %v675 = vpack.c.b16 %v522, %v513
  %v676 = vpack.c.b16 %v523, %v514
  %v677 = vpack.c.b16 %v524, %v515
  %v678 = vpack.c.b16 %v525, %v516
  %v679 = vpack.c.b16 %v526, %v517
  %v680 = vpack.c.b16 %v536, %v527
  %v681 = vpack.c.b16 %v537, %v528
  %v682 = vpack.c.b16 %v538, %v529
  %v683 = vpack.c.b16 %v539, %v530
  %v684 = vpack.c.b16 %v540, %v531
  %v685 = vpack.c.b16 %v541, %v532
  %v686 = vpack.c.b16 %v542, %v533
  %v687 = vpack.c.b16 %v543, %v534
  %v688 = vpack.c.b16 %v544, %v535
  %v689 = vpack.c.b16 %v554, %v545
  %v690 = vpack.c.b16 %v555, %v546
  %v691 = vpack.c.b16 %v556, %v547
  %v692 = vpack.c.b16 %v557, %v548
  %v693 = vpack.c.b16 %v558, %v549
  %v694 = vpack.c.b16 %v559, %v550
  %v695 = vpack.c.b16 %v560, %v551
  %v696 = vpack.c.b16 %v561, %v552
  %v697 = vpack.c.b16 %v562, %v553
  %v698 = vpack.c.b16 %v572, %v563
  %v699 = vpack.c.b16 %v573, %v564
  %v700 = vpack.c.b16 %v574, %v565
  %v701 = vpack.c.b16 %v575, %v566
  %v702 = vpack.c.b16 %v576, %v567
  %v703 = vpack.c.b16 %v577, %v568
  %v704 = vpack.c.b16 %v578, %v569
  %v705 = vpack.c.b16 %v579, %v570
  %v706 = vpack.c.b16 %v580, %v571
  %v707 = vpack.c.b16 %v590, %v581
  %v708 = vpack.c.b16 %v591, %v582
  %v709 = vpack.c.b16 %v592, %v583
  %v710 = vpack.c.b16 %v593, %v584
  %v711 = vpack.c.b16 %v594, %v585
  %v712 = vpack.c.b16 %v595, %v586
  %v713 = vpack.c.b16 %v596, %v587
  %v714 = vpack.c.b16 %v597, %v588
  %v715 = vpack.c.b16 %v598, %v589
  %v716 = vpack.c.b16 %v608, %v599
  %v717 = vpack.c.b16 %v609, %v600
  %v718 = vpack.c.b16 %v610, %v601
  %v719 = vpack.c.b16 %v611, %v602
  %v720 = vpack.c.b16 %v612, %v603
  %v721 = vpack.c.b16 %v613, %v604
  %v722 = vpack.c.b16 %v614, %v605
  %v723 = vpack.c.b16 %v615, %v606
  %v724 = vpack.c.b16 %v616, %v607
  %v961 = vunpack.c.l.b16 %v141
  %v962 = vunpack.c.h.b16 %v141
  %v963 = vunpack.c.l.b16 %v142
  %v964 = vunpack.c.h.b16 %v142
  %v965 = vunpack.c.l.b16 %v143
  %v966 = vunpack.c.h.b16 %v143
  %v967 = vunpack.c.l.b16 %v144
  %v968 = vunpack.c.h.b16 %v144
  %v969 = vunpack.c.l.b16 %v145
  %v970 = vunpack.c.h.b16 %v145
  %v971 = vunpack.c.l.b16 %v146
  %v972 = vunpack.c.h.b16 %v146
  %v973 = vunpack.c.l.b16 %v147
  %v974 = vunpack.c.h.b16 %v147
  %v975 = vunpack.c.l.b16 %v148
  %v976 = vunpack.c.h.b16 %v148
  %v977 = vunpack.c.l.b16 %v149
  %v978 = vunpack.c.h.b16 %v149
  %v979 = vunpack.c.l.b16 %v150
  %v980 = vunpack.c.h.b16 %v150
  %v981 = vunpack.c.l.b16 %v151
  %v982 = vunpack.c.h.b16 %v151
  %v983 = vunpack.c.l.b16 %v152
  %v984 = vunpack.c.h.b16 %v152
  %v985 = vunpack.c.l.b16 %v153
  %v986 = vunpack.c.h.b16 %v153
  %v987 = vunpack.c.l.b16 %v154
  %v988 = vunpack.c.h.b16 %v154
  %v989 = vunpack.c.l.b16 %v155
  %v990 = vunpack.c.h.b16 %v155
  %v991 = vunpack.c.l.b16 %v156
  %v992 = vunpack.c.h.b16 %v156
  %v993 = vunpack.c.l.b16 %v157
  %v994 = vunpack.c.h.b16 %v157
  %v995 = vunpack.c.l.b16 %v158
  %v996 = vunpack.c.h.b16 %v158
  %v997 = vunpack.c.l.b16 %v159
  %v998 = vunpack.c.h.b16 %v159
  %v999 = vunpack.c.l.b16 %v160
  %v1000 = vunpack.c.h.b16 %v160
  %v1001 = vunpack.c.l.b16 %v161
  %v1002 = vunpack.c.h.b16 %v161
  %v1003 = vunpack.c.l.b16 %v162
  %v1004 = vunpack.c.h.b16 %v162
  %v1005 = vunpack.c.l.b16 %v163
  %v1006 = vunpack.c.h.b16 %v163
  %v1007 = vunpack.c.l.b16 %v164
  %v1008 = vunpack.c.h.b16 %v164
  %v1009 = vunpack.c.l.b16 %v165
  %v1010 = vunpack.c.h.b16 %v165
  %v1011 = vunpack.c.l.b16 %v166
  %v1012 = vunpack.c.h.b16 %v166
  %v1013 = vunpack.c.l.b16 %v167
  %v1014 = vunpack.c.h.b16 %v167
  %v1015 = vunpack.c.l.b16 %v168
  %v1016 = vunpack.c.h.b16 %v168
  %v1017 = vunpack.c.l.b16 %v169
  %v1018 = vunpack.c.h.b16 %v169
  %v1019 = vunpack.c.l.b16 %v170
  %v1020 = vunpack.c.h.b16 %v170
  %v1021 = vunpack.c.l.b16 %v171
  %v1022 = vunpack.c.h.b16 %v171
  %v1023 = vunpack.c.l.b16 %v172
  %v1024 = vunpack.c.h.b16 %v172
  %v1025 = vunpack.c.l.b16 %v173
  %v1026 = vunpack.c.h.b16 %v173
  %v1027 = vunpack.c.l.b16 %v174
  %v1028 = vunpack.c.h.b16 %v174
  %v1029 = vunpack.c.l.b16 %v175
  %v1030 = vunpack.c.h.b16 %v175
  %v1031 = vunpack.c.l.b16 %v176
  %v1032 = vunpack.c.h.b16 %v176
  %v1033 = vunpack.c.l.b16 %v177
  %v1034 = vunpack.c.h.b16 %v177
  %v1035 = vunpack.c.l.b16 %v178
  %v1036 = vunpack.c.h.b16 %v178
  %v1037 = vunpack.c.l.b16 %v179
  %v1038 = vunpack.c.h.b16 %v179
  %v1039 = vunpack.c.l.b16 %v180
  %v1040 = vunpack.c.h.b16 %v180
  %v1041 = vunpack.c.l.b16 %v181
  %v1042 = vunpack.c.h.b16 %v181
  %v1043 = vunpack.c.l.b16 %v182
  %v1044 = vunpack.c.h.b16 %v182
  %v1045 = vunpack.c.l.b16 %v183
  %v1046 = vunpack.c.h.b16 %v183
  %v1047 = vunpack.c.l.b16 %v184
  %v1048 = vunpack.c.h.b16 %v184
  %v1049 = vunpack.c.l.b16 %v185
  %v1050 = vunpack.c.h.b16 %v185
  %v1051 = vunpack.c.l.b16 %v186
  %v1052 = vunpack.c.h.b16 %v186
  %v1053 = vunpack.c.l.b16 %v187
  %v1054 = vunpack.c.h.b16 %v187
  %v1055 = vunpack.c.l.b16 %v188
  %v1056 = vunpack.c.h.b16 %v188
  %v1057 = vunpack.c.l.b16 %v189
  %v1058 = vunpack.c.h.b16 %v189
  %v1059 = vunpack.c.l.b16 %v190
  %v1060 = vunpack.c.h.b16 %v190
  %v1061 = vunpack.c.l.b16 %v191
  %v1062 = vunpack.c.h.b16 %v191
  %v1063 = vunpack.c.l.b16 %v192
  %v1064 = vunpack.c.h.b16 %v192
  %v1065 = vunpack.c.l.b16 %v193
  %v1066 = vunpack.c.h.b16 %v193
  %v1067 = vunpack.c.l.b16 %v194
  %v1068 = vunpack.c.h.b16 %v194
  %v1069 = vunpack.c.l.b16 %v195
  %v1070 = vunpack.c.h.b16 %v195
  %v1071 = vunpack.c.l.b16 %v196
  %v1072 = vunpack.c.h.b16 %v196
  %v1073 = vunpack.c.l.b16 %v197
  %v1074 = vunpack.c.h.b16 %v197
  %v1075 = vunpack.c.l.b16 %v198
  %v1076 = vunpack.c.h.b16 %v198
  %v1077 = vunpack.c.l.b16 %v199
  %v1078 = vunpack.c.h.b16 %v199
  %v1079 = vunpack.c.l.b16 %v200
  %v1080 = vunpack.c.h.b16 %v200
  %v1081 = vunpack.c.l.b16 %v201
  %v1082 = vunpack.c.h.b16 %v201
  %v1083 = vunpack.c.l.b16 %v202
  %v1084 = vunpack.c.h.b16 %v202
  %v1085 = vunpack.c.l.b16 %v203
  %v1086 = vunpack.c.h.b16 %v203
  %v1087 = vunpack.c.l.b16 %v204
  %v1088 = vunpack.c.h.b16 %v204
  %v1089 = vunpack.c.l.b16 %v205
  %v1090 = vunpack.c.h.b16 %v205
  %v1091 = vunpack.c.l.b16 %v206
  %v1092 = vunpack.c.h.b16 %v206
  %v1093 = vunpack.c.l.b16 %v207
  %v1094 = vunpack.c.h.b16 %v207
  %v1095 = vunpack.c.l.b16 %v208
  %v1096 = vunpack.c.h.b16 %v208
  %v1097 = vunpack.c.l.b16 %v209
  %v1098 = vunpack.c.h.b16 %v209
  %v1099 = vunpack.c.l.b16 %v210
  %v1100 = vunpack.c.h.b16 %v210
  %v1101 = vunpack.c.l.b16 %v211
  %v1102 = vunpack.c.h.b16 %v211
  %v1103 = vunpack.c.l.b16 %v212
  %v1104 = vunpack.c.h.b16 %v212
  %v1105 = vunpack.c.l.b16 %v213
  %v1106 = vunpack.c.h.b16 %v213
  %v1107 = vunpack.c.l.b16 %v214
  %v1108 = vunpack.c.h.b16 %v214
  %v1109 = vunpack.c.l.b16 %v215
  %v1110 = vunpack.c.h.b16 %v215
  %v1111 = vunpack.c.l.b16 %v216
  %v1112 = vunpack.c.h.b16 %v216
  %v1113 = vunpack.c.l.b16 %v217
  %v1114 = vunpack.c.h.b16 %v217
  %v1115 = vunpack.c.l.b16 %v218
  %v1116 = vunpack.c.h.b16 %v218
  %v1117 = vunpack.c.l.b16 %v219
  %v1118 = vunpack.c.h.b16 %v219
  %v1119 = vunpack.c.l.b16 %v220
  %v1120 = vunpack.c.h.b16 %v220
  %v1121 = vunpack.c.l.b16 %v221
  %v1122 = vunpack.c.h.b16 %v221
  %v1123 = vunpack.c.l.b16 %v222
  %v1124 = vunpack.c.h.b16 %v222
  %v1125 = vunpack.c.l.b16 %v223
  %v1126 = vunpack.c.h.b16 %v223
  %v1127 = vunpack.c.l.b16 %v224
  %v1128 = vunpack.c.h.b16 %v224
  %v1129 = vunpack.c.l.b16 %v225
  %v1130 = vunpack.c.h.b16 %v225
  %v1131 = vunpack.c.l.b16 %v226
  %v1132 = vunpack.c.h.b16 %v226
  %v1133 = vunpack.c.l.b16 %v227
  %v1134 = vunpack.c.h.b16 %v227
  %v1135 = vunpack.c.l.b16 %v228
  %v1136 = vunpack.c.h.b16 %v228
  %v1137 = vunpack.c.l.b16 %v229
  %v1138 = vunpack.c.h.b16 %v229
  %v1139 = vunpack.c.l.b16 %v230
  %v1140 = vunpack.c.h.b16 %v230
  %v1141 = vunpack.c.l.b16 %v231
  %v1142 = vunpack.c.h.b16 %v231
  %v1143 = vunpack.c.l.b16 %v232
  %v1144 = vunpack.c.h.b16 %v232
  %v1145 = vunpack.c.l.b16 %v233
  %v1146 = vunpack.c.h.b16 %v233
  %v1147 = vunpack.c.l.b16 %v234
  %v1148 = vunpack.c.h.b16 %v234
  %v1149 = vunpack.c.l.b16 %v235
  %v1150 = vunpack.c.h.b16 %v235
  %v1151 = vunpack.c.l.b16 %v236
  %v1152 = vunpack.c.h.b16 %v236
  %v1153 = vunpack.c.l.b16 %v237
  %v1154 = vunpack.c.h.b16 %v237
  %v1155 = vunpack.c.l.b16 %v238
  %v1156 = vunpack.c.h.b16 %v238
  %v1157 = vunpack.c.l.b16 %v239
  %v1158 = vunpack.c.h.b16 %v239
  %v1159 = vunpack.c.l.b16 %v240
  %v1160 = vunpack.c.h.b16 %v240
  %v1161 = vunpack.c.l.b16 %v241
  %v1162 = vunpack.c.h.b16 %v241
  %v1163 = vunpack.c.l.b16 %v242
  %v1164 = vunpack.c.h.b16 %v242
  %v1165 = vunpack.c.l.b16 %v243
  %v1166 = vunpack.c.h.b16 %v243
  %v1167 = vunpack.c.l.b16 %v244
  %v1168 = vunpack.c.h.b16 %v244
  %v1169 = vunpack.c.l.b16 %v245
  %v1170 = vunpack.c.h.b16 %v245
  %v1171 = vunpack.c.l.b16 %v246
  %v1172 = vunpack.c.h.b16 %v246
  %v1173 = vunpack.c.l.b16 %v247
  %v1174 = vunpack.c.h.b16 %v247
  %v1175 = vunpack.c.l.b16 %v248
  %v1176 = vunpack.c.h.b16 %v248
  %v1177 = vunpack.c.l.b16 %v249
  %v1178 = vunpack.c.h.b16 %v249
  %v1179 = vunpack.c.l.b16 %v250
  %v1180 = vunpack.c.h.b16 %v250
  %v1181 = vunpack.c.l.b16 %v251
  %v1182 = vunpack.c.h.b16 %v251
  %v1183 = vunpack.c.l.b16 %v252
  %v1184 = vunpack.c.h.b16 %v252
  %v1185 = vunpack.c.l.b16 %v253
  %v1186 = vunpack.c.h.b16 %v253
  %v1187 = vunpack.c.l.b16 %v254
  %v1188 = vunpack.c.h.b16 %v254
  %v1189 = vunpack.c.l.b16 %v255
  %v1190 = vunpack.c.h.b16 %v255
  %v1191 = vunpack.c.l.b16 %v256
  %v1192 = vunpack.c.h.b16 %v256
  %v1193 = vunpack.c.l.b16 %v257
  %v1194 = vunpack.c.h.b16 %v257
  %v1195 = vunpack.c.l.b16 %v258
  %v1196 = vunpack.c.h.b16 %v258
  %v1197 = vunpack.c.l.b16 %v259
  %v1198 = vunpack.c.h.b16 %v259
  %v1199 = vunpack.c.l.b16 %v260
  %v1200 = vunpack.c.h.b16 %v260
  %v1201 = vunpack.c.l.b16 %v261
  %v1202 = vunpack.c.h.b16 %v261
  %v1203 = vunpack.c.l.b16 %v262
  %v1204 = vunpack.c.h.b16 %v262
  %v1205 = vunpack.c.l.b16 %v263
  %v1206 = vunpack.c.h.b16 %v263
  %v1207 = vunpack.c.l.b16 %v264
  %v1208 = vunpack.c.h.b16 %v264
  %v1209 = vunpack.c.l.b16 %v265
  %v1210 = vunpack.c.h.b16 %v265
  %v1211 = vunpack.c.l.b16 %v266
  %v1212 = vunpack.c.h.b16 %v266
  %v1213 = vunpack.c.l.b16 %v267
  %v1214 = vunpack.c.h.b16 %v267
  %v1215 = vunpack.c.l.b16 %v268
  %v1216 = vunpack.c.h.b16 %v268
  %v1217 = vunpack.c.l.b16 %v269
  %v1218 = vunpack.c.h.b16 %v269
  %v1219 = vunpack.c.l.b16 %v270
  %v1220 = vunpack.c.h.b16 %v270
  %v1221 = vunpack.c.l.b16 %v271
  %v1222 = vunpack.c.h.b16 %v271
  %v1223 = vunpack.c.l.b16 %v272
  %v1224 = vunpack.c.h.b16 %v272
  %v1225 = vunpack.c.l.b16 %v273
  %v1226 = vunpack.c.h.b16 %v273
  %v1227 = vunpack.c.l.b16 %v274
  %v1228 = vunpack.c.h.b16 %v274
  %v1229 = vunpack.c.l.b16 %v275
  %v1230 = vunpack.c.h.b16 %v275
  %v1231 = vunpack.c.l.b16 %v276
  %v1232 = vunpack.c.h.b16 %v276
  %v1233 = vunpack.c.l.b16 %v277
  %v1234 = vunpack.c.h.b16 %v277
  %v1235 = vunpack.c.l.b16 %v278
  %v1236 = vunpack.c.h.b16 %v278
  %v1237 = vunpack.c.l.b16 %v279
  %v1238 = vunpack.c.h.b16 %v279
  %v1239 = vunpack.c.l.b16 %v280
  %v1240 = vunpack.c.h.b16 %v280
  %v1241 = vpack.c.b16 %v963, %v961
  %v1242 = vpack.c.b16 %v964, %v962
  %v1243 = vpack.c.b16 %v967, %v965
  %v1244 = vpack.c.b16 %v968, %v966
  %v1245 = vpack.c.b16 %v971, %v969
  %v1246 = vpack.c.b16 %v972, %v970
  %v1247 = vpack.c.b16 %v975, %v973
  %v1248 = vpack.c.b16 %v976, %v974
  %v1249 = vpack.c.b16 %v979, %v977
  %v1250 = vpack.c.b16 %v980, %v978
  %v1251 = vpack.c.b16 %v983, %v981
  %v1252 = vpack.c.b16 %v984, %v982
  %v1253 = vpack.c.b16 %v987, %v985
  %v1254 = vpack.c.b16 %v988, %v986
  %v1255 = vpack.c.b16 %v991, %v989
  %v1256 = vpack.c.b16 %v992, %v990
  %v1257 = vpack.c.b16 %v995, %v993
  %v1258 = vpack.c.b16 %v996, %v994
  %v1259 = vpack.c.b16 %v999, %v997
  %v1260 = vpack.c.b16 %v1000, %v998
  %v1261 = vpack.c.b16 %v1003, %v1001
  %v1262 = vpack.c.b16 %v1004, %v1002
  %v1263 = vpack.c.b16 %v1007, %v1005
  %v1264 = vpack.c.b16 %v1008, %v1006
  %v1265 = vpack.c.b16 %v1011, %v1009
  %v1266 = vpack.c.b16 %v1012, %v1010
  %v1267 = vpack.c.b16 %v1015, %v1013
  %v1268 = vpack.c.b16 %v1016, %v1014
  %v1269 = vpack.c.b16 %v1019, %v1017
  %v1270 = vpack.c.b16 %v1020, %v1018
  %v1271 = vpack.c.b16 %v1023, %v1021
  %v1272 = vpack.c.b16 %v1024, %v1022
  %v1273 = vpack.c.b16 %v1027, %v1025
  %v1274 = vpack.c.b16 %v1028, %v1026
  %v1275 = vpack.c.b16 %v1031, %v1029
  %v1276 = vpack.c.b16 %v1032, %v1030
  %v1277 = vpack.c.b16 %v1035, %v1033
  %v1278 = vpack.c.b16 %v1036, %v1034
  %v1279 = vpack.c.b16 %v1039, %v1037
  %v1280 = vpack.c.b16 %v1040, %v1038
  %v1281 = vpack.c.b16 %v1043, %v1041
  %v1282 = vpack.c.b16 %v1044, %v1042
  %v1283 = vpack.c.b16 %v1047, %v1045
  %v1284 = vpack.c.b16 %v1048, %v1046
  %v1285 = vpack.c.b16 %v1051, %v1049
  %v1286 = vpack.c.b16 %v1052, %v1050
  %v1287 = vpack.c.b16 %v1055, %v1053
  %v1288 = vpack.c.b16 %v1056, %v1054
  %v1289 = vpack.c.b16 %v1059, %v1057
  %v1290 = vpack.c.b16 %v1060, %v1058
  %v1291 = vpack.c.b16 %v1063, %v1061
  %v1292 = vpack.c.b16 %v1064, %v1062
  %v1293 = vpack.c.b16 %v1067, %v1065
  %v1294 = vpack.c.b16 %v1068, %v1066
  %v1295 = vpack.c.b16 %v1071, %v1069
  %v1296 = vpack.c.b16 %v1072, %v1070
  %v1297 = vpack.c.b16 %v1075, %v1073
  %v1298 = vpack.c.b16 %v1076, %v1074
  %v1299 = vpack.c.b16 %v1079, %v1077
  %v1300 = vpack.c.b16 %v1080, %v1078
  %v1301 = vpack.c.b16 %v1083, %v1081
  %v1302 = vpack.c.b16 %v1084, %v1082
  %v1303 = vpack.c.b16 %v1087, %v1085
  %v1304 = vpack.c.b16 %v1088, %v1086
  %v1305 = vpack.c.b16 %v1091, %v1089
  %v1306 = vpack.c.b16 %v1092, %v1090
  %v1307 = vpack.c.b16 %v1095, %v1093
  %v1308 = vpack.c.b16 %v1096, %v1094
  %v1309 = vpack.c.b16 %v1099, %v1097
  %v1310 = vpack.c.b16 %v1100, %v1098
  %v1311 = vpack.c.b16 %v1103, %v1101
  %v1312 = vpack.c.b16 %v1104, %v1102
  %v1313 = vpack.c.b16 %v1107, %v1105
  %v1314 = vpack.c.b16 %v1108, %v1106
  %v1315 = vpack.c.b16 %v1111, %v1109
  %v1316 = vpack.c.b16 %v1112, %v1110
  %v1317 = vpack.c.b16 %v1115, %v1113
  %v1318 = vpack.c.b16 %v1116, %v1114
  %v1319 = vpack.c.b16 %v1119, %v1117
  %v1320 = vpack.c.b16 %v1120, %v1118
  %v1321 = vpack.c.b16 %v1123, %v1121
  %v1322 = vpack.c.b16 %v1124, %v1122
  %v1323 = vpack.c.b16 %v1127, %v1125
  %v1324 = vpack.c.b16 %v1128, %v1126
  %v1325 = vpack.c.b16 %v1131, %v1129
  %v1326 = vpack.c.b16 %v1132, %v1130
  %v1327 = vpack.c.b16 %v1135, %v1133
  %v1328 = vpack.c.b16 %v1136, %v1134
  %v1329 = vpack.c.b16 %v1139, %v1137
  %v1330 = vpack.c.b16 %v1140, %v1138
  %v1331 = vpack.c.b16 %v1143, %v1141
  %v1332 = vpack.c.b16 %v1144, %v1142
  %v1333 = vpack.c.b16 %v1147, %v1145
  %v1334 = vpack.c.b16 %v1148, %v1146
  %v1335 = vpack.c.b16 %v1151, %v1149
  %v1336 = vpack.c.b16 %v1152, %v1150
  %v1337 = vpack.c.b16 %v1155, %v1153
  %v1338 = vpack.c.b16 %v1156, %v1154
  %v1339 = vpack.c.b16 %v1159, %v1157
  %v1340 = vpack.c.b16 %v1160, %v1158
  %v1341 = vpack.c.b16 %v1163, %v1161
  %v1342 = vpack.c.b16 %v1164, %v1162
  %v1343 = vpack.c.b16 %v1167, %v1165
  %v1344 = vpack.c.b16 %v1168, %v1166
  %v1345 = vpack.c.b16 %v1171, %v1169
  %v1346 = vpack.c.b16 %v1172, %v1170
  %v1347 = vpack.c.b16 %v1175, %v1173
  %v1348 = vpack.c.b16 %v1176, %v1174
  %v1349 = vpack.c.b16 %v1179, %v1177
  %v1350 = vpack.c.b16 %v1180, %v1178
  %v1351 = vpack.c.b16 %v1183, %v1181
  %v1352 = vpack.c.b16 %v1184, %v1182
  %v1353 = vpack.c.b16 %v1187, %v1185
  %v1354 = vpack.c.b16 %v1188, %v1186
  %v1355 = vpack.c.b16 %v1191, %v1189
  %v1356 = vpack.c.b16 %v1192, %v1190
  %v1357 = vpack.c.b16 %v1195, %v1193
  %v1358 = vpack.c.b16 %v1196, %v1194
  %v1359 = vpack.c.b16 %v1199, %v1197
  %v1360 = vpack.c.b16 %v1200, %v1198
  %v1361 = vpack.c.b16 %v1203, %v1201
  %v1362 = vpack.c.b16 %v1204, %v1202
  %v1363 = vpack.c.b16 %v1207, %v1205
  %v1364 = vpack.c.b16 %v1208, %v1206
  %v1365 = vpack.c.b16 %v1211, %v1209
  %v1366 = vpack.c.b16 %v1212, %v1210
  %v1367 = vpack.c.b16 %v1215, %v1213
  %v1368 = vpack.c.b16 %v1216, %v1214
  %v1369 = vpack.c.b16 %v1219, %v1217
  %v1370 = vpack.c.b16 %v1220, %v1218
  %v1371 = vpack.c.b16 %v1223, %v1221
  %v1372 = vpack.c.b16 %v1224, %v1222
  %v1373 = vpack.c.b16 %v1227, %v1225
  %v1374 = vpack.c.b16 %v1228, %v1226
  %v1375 = vpack.c.b16 %v1231, %v1229
  %v1376 = vpack.c.b16 %v1232, %v1230
  %v1377 = vpack.c.b16 %v1235, %v1233
  %v1378 = vpack.c.b16 %v1236, %v1234
  %v1379 = vpack.c.b16 %v1239, %v1237
  %v1380 = vpack.c.b16 %v1240, %v1238
  %vm1521 = vcmask 785408
  %v1523 = vsel %vm1521, %v625, 0
  %v1526 = vsel %vm1521, %v634, 0
  %v1529 = vsel %vm1521, %v643, 0
  %v1532 = vsel %vm1521, %v652, 0
  %v1535 = vsel %vm1521, %v661, 0
  %v1538 = vsel %vm1521, %v670, 0
  %v1541 = vsel %vm1521, %v679, 0
  %v1544 = vsel %vm1521, %v688, 0
  %v1547 = vsel %vm1521, %v697, 0
  %v1550 = vsel %vm1521, %v706, 0
  %v1553 = vsel %vm1521, %v715, 0
  %v1556 = vsel %vm1521, %v724, 0
  %1558 = vmatprep.subr.bf16.mxu0 %v1242
  %1559 = vmatpush1.bf16.msra.mxu0 %v1241
  %1560 = vmatprep.subr.bf16.mxu0 %v1244
  %1561 = vmatpush1.bf16.msra.mxu0 %v1243
  %1562 = vmatprep.subr.bf16.mxu0 %v1246
  %1563 = vmatpush1.bf16.msra.mxu0 %v1245
  %1564 = vmatprep.subr.bf16.mxu0 %v1248
  %1565 = vmatpush1.bf16.msra.mxu0 %v1247
  %1566 = vmatprep.subr.bf16.mxu0 %v1250
  %1567 = vmatpush1.bf16.msra.mxu0 %v1249
  %1568 = vmatprep.subr.bf16.mxu0 %v1252
  %1569 = vmatpush1.bf16.msra.mxu0 %v1251
  %1570 = vmatprep.subr.bf16.mxu0 %v1254
  %1571 = vmatpush1.bf16.msra.mxu0 %v1253
  %1572 = vmatprep.subr.bf16.mxu0 %v1256
  %1573 = vmatpush1.bf16.msra.mxu0 %v1255
  %1574 = vmatprep.subr.bf16.mxu0 %v1258
  %1575 = vmatpush1.bf16.msra.mxu0 %v1257
  %1576 = vmatprep.subr.bf16.mxu0 %v1260
  %1577 = vmatpush1.bf16.msra.mxu0 %v1259
  %1578 = vmatprep.subr.bf16.mxu0 %v1262
  %1579 = vmatpush1.bf16.msra.mxu0 %v1261
  %1580 = vmatprep.subr.bf16.mxu0 %v1264
  %1581 = vmatpush1.bf16.msra.mxu0 %v1263
  %1582 = vmatprep.subr.bf16.mxu0 %v1266
  %1583 = vmatpush1.bf16.msra.mxu0 %v1265
  %1584 = vmatprep.subr.bf16.mxu0 %v1268
  %1585 = vmatpush1.bf16.msra.mxu0 %v1267
  %1586 = vmatprep.subr.bf16.mxu0 %v1270
  %1587 = vmatpush1.bf16.msra.mxu0 %v1269
  %1588 = vmatprep.subr.bf16.mxu0 %v1272
  %1589 = vmatpush1.bf16.msra.mxu0 %v1271
  %1590 = vmatprep.mubr.bf16.mxu0 %v618
  %1591 = vmatmul.mubr.bf16.gmra.mrb[0].mxu0 %v617
  %v1592 = vpop.f32.mrb[0].mxu0
  %v1593 = vadd.f32 0.0, %v1592
  %v1594 = vpop.f32.mrb[0].mxu0
  %v1595 = vadd.f32 0.0, %v1594
  %v1596 = vpop.f32.mrb[0].mxu0
  %v1597 = vadd.f32 0.0, %v1596
  %v1598 = vpop.f32.mrb[0].mxu0
  %v1599 = vadd.f32 0.0, %v1598
  %1600 = vmatprep.mubr.bf16.mxu0 %v627
  %1601 = vmatmul.mubr.bf16.gmra.mrb[0].mxu0 %v626
  %v1602 = vpop.f32.mrb[0].mxu0
  %v1603 = vadd.f32 0.0, %v1602
  %v1604 = vpop.f32.mrb[0].mxu0
  %v1605 = vadd.f32 0.0, %v1604
  %v1606 = vpop.f32.mrb[0].mxu0
  %v1607 = vadd.f32 0.0, %v1606
  %v1608 = vpop.f32.mrb[0].mxu0
  %v1609 = vadd.f32 0.0, %v1608
  %1610 = vmatprep.mubr.bf16.mxu0 %v636
  %1611 = vmatmul.mubr.bf16.gmra.mrb[0].mxu0 %v635
  %v1612 = vpop.f32.mrb[0].mxu0
  %v1613 = vadd.f32 0.0, %v1612
  %v1614 = vpop.f32.mrb[0].mxu0
  %v1615 = vadd.f32 0.0, %v1614
  %v1616 = vpop.f32.mrb[0].mxu0
  %v1617 = vadd.f32 0.0, %v1616
  %v1618 = vpop.f32.mrb[0].mxu0
  %v1619 = vadd.f32 0.0, %v1618
  %1620 = vmatprep.mubr.bf16.mxu0 %v645
  %1621 = vmatmul.mubr.bf16.gmra.mrb[0].mxu0 %v644
  %v1622 = vpop.f32.mrb[0].mxu0
  %v1623 = vadd.f32 0.0, %v1622
  %v1624 = vpop.f32.mrb[0].mxu0
  %v1625 = vadd.f32 0.0, %v1624
  %v1626 = vpop.f32.mrb[0].mxu0
  %v1627 = vadd.f32 0.0, %v1626
  %v1628 = vpop.f32.mrb[0].mxu0
  %v1629 = vadd.f32 0.0, %v1628
  %1630 = vmatprep.mubr.bf16.mxu0 %v654
  %1631 = vmatmul.mubr.bf16.gmra.mrb[0].mxu0 %v653
  %v1632 = vpop.f32.mrb[0].mxu0
  %v1633 = vadd.f32 0.0, %v1632
  %v1634 = vpop.f32.mrb[0].mxu0
  %v1635 = vadd.f32 0.0, %v1634
  %v1636 = vpop.f32.mrb[0].mxu0
  %v1637 = vadd.f32 0.0, %v1636
  %v1638 = vpop.f32.mrb[0].mxu0
  %v1639 = vadd.f32 0.0, %v1638
  %1640 = vmatprep.mubr.bf16.mxu0 %v663
  %1641 = vmatmul.mubr.bf16.gmra.mrb[0].mxu0 %v662
  %v1642 = vpop.f32.mrb[0].mxu0
  %v1643 = vadd.f32 0.0, %v1642
  %v1644 = vpop.f32.mrb[0].mxu0
  %v1645 = vadd.f32 0.0, %v1644
  %v1646 = vpop.f32.mrb[0].mxu0
  %v1647 = vadd.f32 0.0, %v1646
  %v1648 = vpop.f32.mrb[0].mxu0
  %v1649 = vadd.f32 0.0, %v1648
  %1650 = vmatprep.mubr.bf16.mxu0 %v672
  %1651 = vmatmul.mubr.bf16.gmra.mrb[0].mxu0 %v671
  %v1652 = vpop.f32.mrb[0].mxu0
  %v1653 = vadd.f32 0.0, %v1652
  %v1654 = vpop.f32.mrb[0].mxu0
  %v1655 = vadd.f32 0.0, %v1654
  %v1656 = vpop.f32.mrb[0].mxu0
  %v1657 = vadd.f32 0.0, %v1656
  %v1658 = vpop.f32.mrb[0].mxu0
  %v1659 = vadd.f32 0.0, %v1658
  %1660 = vmatprep.mubr.bf16.mxu0 %v681
  %1661 = vmatmul.mubr.bf16.gmra.mrb[0].mxu0 %v680
  %v1662 = vpop.f32.mrb[0].mxu0
  %v1663 = vadd.f32 0.0, %v1662
  %v1664 = vpop.f32.mrb[0].mxu0
  %v1665 = vadd.f32 0.0, %v1664
  %v1666 = vpop.f32.mrb[0].mxu0
  %v1667 = vadd.f32 0.0, %v1666
  %v1668 = vpop.f32.mrb[0].mxu0
  %v1669 = vadd.f32 0.0, %v1668
  %1670 = vmatprep.mubr.bf16.mxu0 %v690
  %1671 = vmatmul.mubr.bf16.gmra.mrb[0].mxu0 %v689
  %v1672 = vpop.f32.mrb[0].mxu0
  %v1673 = vadd.f32 0.0, %v1672
  %v1674 = vpop.f32.mrb[0].mxu0
  %v1675 = vadd.f32 0.0, %v1674
  %v1676 = vpop.f32.mrb[0].mxu0
  %v1677 = vadd.f32 0.0, %v1676
  %v1678 = vpop.f32.mrb[0].mxu0
  %v1679 = vadd.f32 0.0, %v1678
  %1680 = vmatprep.mubr.bf16.mxu0 %v699
  %1681 = vmatmul.mubr.bf16.gmra.mrb[0].mxu0 %v698
  %v1682 = vpop.f32.mrb[0].mxu0
  %v1683 = vadd.f32 0.0, %v1682
  %v1684 = vpop.f32.mrb[0].mxu0
  %v1685 = vadd.f32 0.0, %v1684
  %v1686 = vpop.f32.mrb[0].mxu0
  %v1687 = vadd.f32 0.0, %v1686
  %v1688 = vpop.f32.mrb[0].mxu0
  %v1689 = vadd.f32 0.0, %v1688
  %1690 = vmatprep.mubr.bf16.mxu0 %v708
  %1691 = vmatmul.mubr.bf16.gmra.mrb[0].mxu0 %v707
  %v1692 = vpop.f32.mrb[0].mxu0
  %v1693 = vadd.f32 0.0, %v1692
  %v1694 = vpop.f32.mrb[0].mxu0
  %v1695 = vadd.f32 0.0, %v1694
  %v1696 = vpop.f32.mrb[0].mxu0
  %v1697 = vadd.f32 0.0, %v1696
  %v1698 = vpop.f32.mrb[0].mxu0
  %v1699 = vadd.f32 0.0, %v1698
  %1700 = vmatprep.mubr.bf16.mxu0 %v717
  %1701 = vmatmul.mubr.bf16.gmra.mrb[0].mxu0 %v716
  %v1702 = vpop.f32.mrb[0].mxu0
  %v1703 = vadd.f32 0.0, %v1702
  %v1704 = vpop.f32.mrb[0].mxu0
  %v1705 = vadd.f32 0.0, %v1704
  %v1706 = vpop.f32.mrb[0].mxu0
  %v1707 = vadd.f32 0.0, %v1706
  %v1708 = vpop.f32.mrb[0].mxu0
  %v1709 = vadd.f32 0.0, %v1708
  %1710 = vdwg.mxu0
  %1711 = vmatprep.subr.bf16.mxu0 %v1274
  %1712 = vmatpush1.bf16.msra.mxu0 %v1273
  %1713 = vmatprep.subr.bf16.mxu0 %v1276
  %1714 = vmatpush1.bf16.msra.mxu0 %v1275
  %1715 = vmatprep.subr.bf16.mxu0 %v1278
  %1716 = vmatpush1.bf16.msra.mxu0 %v1277
  %1717 = vmatprep.subr.bf16.mxu0 %v1280
  %1718 = vmatpush1.bf16.msra.mxu0 %v1279
  %1719 = vmatprep.subr.bf16.mxu0 %v1282
  %1720 = vmatpush1.bf16.msra.mxu0 %v1281
  %1721 = vmatprep.subr.bf16.mxu0 %v1284
  %1722 = vmatpush1.bf16.msra.mxu0 %v1283
  %1723 = vmatprep.subr.bf16.mxu0 %v1286
  %1724 = vmatpush1.bf16.msra.mxu0 %v1285
  %1725 = vmatprep.subr.bf16.mxu0 %v1288
  %1726 = vmatpush1.bf16.msra.mxu0 %v1287
  %1727 = vmatprep.subr.bf16.mxu0 %v1290
  %1728 = vmatpush1.bf16.msra.mxu0 %v1289
  %1729 = vmatprep.subr.bf16.mxu0 %v1292
  %1730 = vmatpush1.bf16.msra.mxu0 %v1291
  %1731 = vmatprep.subr.bf16.mxu0 %v1294
  %1732 = vmatpush1.bf16.msra.mxu0 %v1293
  %1733 = vmatprep.subr.bf16.mxu0 %v1296
  %1734 = vmatpush1.bf16.msra.mxu0 %v1295
  %1735 = vmatprep.subr.bf16.mxu0 %v1298
  %1736 = vmatpush1.bf16.msra.mxu0 %v1297
  %1737 = vmatprep.subr.bf16.mxu0 %v1300
  %1738 = vmatpush1.bf16.msra.mxu0 %v1299
  %1739 = vmatprep.subr.bf16.mxu0 %v1302
  %1740 = vmatpush1.bf16.msra.mxu0 %v1301
  %1741 = vmatprep.subr.bf16.mxu0 %v1304
  %1742 = vmatpush1.bf16.msra.mxu0 %v1303
  %1743 = vmatprep.mubr.bf16.mxu0 %v620
  %1744 = vmatmul.mubr.bf16.gmra.mrb[0].mxu0 %v619
  %v1745 = vpop.f32.mrb[0].mxu0
  %v1746 = vadd.f32 %v1593, %v1745
  %v1747 = vpop.f32.mrb[0].mxu0
  %v1748 = vadd.f32 %v1595, %v1747
  %v1749 = vpop.f32.mrb[0].mxu0
  %v1750 = vadd.f32 %v1597, %v1749
  %v1751 = vpop.f32.mrb[0].mxu0
  %v1752 = vadd.f32 %v1599, %v1751
  %1753 = vmatprep.mubr.bf16.mxu0 %v629
  %1754 = vmatmul.mubr.bf16.gmra.mrb[0].mxu0 %v628
  %v1755 = vpop.f32.mrb[0].mxu0
  %v1756 = vadd.f32 %v1603, %v1755
  %v1757 = vpop.f32.mrb[0].mxu0
  %v1758 = vadd.f32 %v1605, %v1757
  %v1759 = vpop.f32.mrb[0].mxu0
  %v1760 = vadd.f32 %v1607, %v1759
  %v1761 = vpop.f32.mrb[0].mxu0
  %v1762 = vadd.f32 %v1609, %v1761
  %1763 = vmatprep.mubr.bf16.mxu0 %v638
  %1764 = vmatmul.mubr.bf16.gmra.mrb[0].mxu0 %v637
  %v1765 = vpop.f32.mrb[0].mxu0
  %v1766 = vadd.f32 %v1613, %v1765
  %v1767 = vpop.f32.mrb[0].mxu0
  %v1768 = vadd.f32 %v1615, %v1767
  %v1769 = vpop.f32.mrb[0].mxu0
  %v1770 = vadd.f32 %v1617, %v1769
  %v1771 = vpop.f32.mrb[0].mxu0
  %v1772 = vadd.f32 %v1619, %v1771
  %1773 = vmatprep.mubr.bf16.mxu0 %v647
  %1774 = vmatmul.mubr.bf16.gmra.mrb[0].mxu0 %v646
  %v1775 = vpop.f32.mrb[0].mxu0
  %v1776 = vadd.f32 %v1623, %v1775
  %v1777 = vpop.f32.mrb[0].mxu0
  %v1778 = vadd.f32 %v1625, %v1777
  %v1779 = vpop.f32.mrb[0].mxu0
  %v1780 = vadd.f32 %v1627, %v1779
  %v1781 = vpop.f32.mrb[0].mxu0
  %v1782 = vadd.f32 %v1629, %v1781
  %1783 = vmatprep.mubr.bf16.mxu0 %v656
  %1784 = vmatmul.mubr.bf16.gmra.mrb[0].mxu0 %v655
  %v1785 = vpop.f32.mrb[0].mxu0
  %v1786 = vadd.f32 %v1633, %v1785
  %v1787 = vpop.f32.mrb[0].mxu0
  %v1788 = vadd.f32 %v1635, %v1787
  %v1789 = vpop.f32.mrb[0].mxu0
  %v1790 = vadd.f32 %v1637, %v1789
  %v1791 = vpop.f32.mrb[0].mxu0
  %v1792 = vadd.f32 %v1639, %v1791
  %1793 = vmatprep.mubr.bf16.mxu0 %v665
  %1794 = vmatmul.mubr.bf16.gmra.mrb[0].mxu0 %v664
  %v1795 = vpop.f32.mrb[0].mxu0
  %v1796 = vadd.f32 %v1643, %v1795
  %v1797 = vpop.f32.mrb[0].mxu0
  %v1798 = vadd.f32 %v1645, %v1797
  %v1799 = vpop.f32.mrb[0].mxu0
  %v1800 = vadd.f32 %v1647, %v1799
  %v1801 = vpop.f32.mrb[0].mxu0
  %v1802 = vadd.f32 %v1649, %v1801
  %1803 = vmatprep.mubr.bf16.mxu0 %v674
  %1804 = vmatmul.mubr.bf16.gmra.mrb[0].mxu0 %v673
  %v1805 = vpop.f32.mrb[0].mxu0
  %v1806 = vadd.f32 %v1653, %v1805
  %v1807 = vpop.f32.mrb[0].mxu0
  %v1808 = vadd.f32 %v1655, %v1807
  %v1809 = vpop.f32.mrb[0].mxu0
  %v1810 = vadd.f32 %v1657, %v1809
  %v1811 = vpop.f32.mrb[0].mxu0
  %v1812 = vadd.f32 %v1659, %v1811
  %1813 = vmatprep.mubr.bf16.mxu0 %v683
  %1814 = vmatmul.mubr.bf16.gmra.mrb[0].mxu0 %v682
  %v1815 = vpop.f32.mrb[0].mxu0
  %v1816 = vadd.f32 %v1663, %v1815
  %v1817 = vpop.f32.mrb[0].mxu0
  %v1818 = vadd.f32 %v1665, %v1817
  %v1819 = vpop.f32.mrb[0].mxu0
  %v1820 = vadd.f32 %v1667, %v1819
  %v1821 = vpop.f32.mrb[0].mxu0
  %v1822 = vadd.f32 %v1669, %v1821
  %1823 = vmatprep.mubr.bf16.mxu0 %v692
  %1824 = vmatmul.mubr.bf16.gmra.mrb[0].mxu0 %v691
  %v1825 = vpop.f32.mrb[0].mxu0
  %v1826 = vadd.f32 %v1673, %v1825
  %v1827 = vpop.f32.mrb[0].mxu0
  %v1828 = vadd.f32 %v1675, %v1827
  %v1829 = vpop.f32.mrb[0].mxu0
  %v1830 = vadd.f32 %v1677, %v1829
  %v1831 = vpop.f32.mrb[0].mxu0
  %v1832 = vadd.f32 %v1679, %v1831
  %1833 = vmatprep.mubr.bf16.mxu0 %v701
  %1834 = vmatmul.mubr.bf16.gmra.mrb[0].mxu0 %v700
  %v1835 = vpop.f32.mrb[0].mxu0
  %v1836 = vadd.f32 %v1683, %v1835
  %v1837 = vpop.f32.mrb[0].mxu0
  %v1838 = vadd.f32 %v1685, %v1837
  %v1839 = vpop.f32.mrb[0].mxu0
  %v1840 = vadd.f32 %v1687, %v1839
  %v1841 = vpop.f32.mrb[0].mxu0
  %v1842 = vadd.f32 %v1689, %v1841
  %1843 = vmatprep.mubr.bf16.mxu0 %v710
  %1844 = vmatmul.mubr.bf16.gmra.mrb[0].mxu0 %v709
  %v1845 = vpop.f32.mrb[0].mxu0
  %v1846 = vadd.f32 %v1693, %v1845
  %v1847 = vpop.f32.mrb[0].mxu0
  %v1848 = vadd.f32 %v1695, %v1847
  %v1849 = vpop.f32.mrb[0].mxu0
  %v1850 = vadd.f32 %v1697, %v1849
  %v1851 = vpop.f32.mrb[0].mxu0
  %v1852 = vadd.f32 %v1699, %v1851
  %1853 = vmatprep.mubr.bf16.mxu0 %v719
  %1854 = vmatmul.mubr.bf16.gmra.mrb[0].mxu0 %v718
  %v1855 = vpop.f32.mrb[0].mxu0
  %v1856 = vadd.f32 %v1703, %v1855
  %v1857 = vpop.f32.mrb[0].mxu0
  %v1858 = vadd.f32 %v1705, %v1857
  %v1859 = vpop.f32.mrb[0].mxu0
  %v1860 = vadd.f32 %v1707, %v1859
  %v1861 = vpop.f32.mrb[0].mxu0
  %v1862 = vadd.f32 %v1709, %v1861
  %1863 = vdwg.mxu0
  %1864 = vmatprep.subr.bf16.mxu0 %v1306
  %1865 = vmatpush1.bf16.msra.mxu0 %v1305
  %1866 = vmatprep.subr.bf16.mxu0 %v1308
  %1867 = vmatpush1.bf16.msra.mxu0 %v1307
  %1868 = vmatprep.subr.bf16.mxu0 %v1310
  %1869 = vmatpush1.bf16.msra.mxu0 %v1309
  %1870 = vmatprep.subr.bf16.mxu0 %v1312
  %1871 = vmatpush1.bf16.msra.mxu0 %v1311
  %1872 = vmatprep.subr.bf16.mxu0 %v1314
  %1873 = vmatpush1.bf16.msra.mxu0 %v1313
  %1874 = vmatprep.subr.bf16.mxu0 %v1316
  %1875 = vmatpush1.bf16.msra.mxu0 %v1315
  %1876 = vmatprep.subr.bf16.mxu0 %v1318
  %1877 = vmatpush1.bf16.msra.mxu0 %v1317
  %1878 = vmatprep.subr.bf16.mxu0 %v1320
  %1879 = vmatpush1.bf16.msra.mxu0 %v1319
  %1880 = vmatprep.subr.bf16.mxu0 %v1322
  %1881 = vmatpush1.bf16.msra.mxu0 %v1321
  %1882 = vmatprep.subr.bf16.mxu0 %v1324
  %1883 = vmatpush1.bf16.msra.mxu0 %v1323
  %1884 = vmatprep.subr.bf16.mxu0 %v1326
  %1885 = vmatpush1.bf16.msra.mxu0 %v1325
  %1886 = vmatprep.subr.bf16.mxu0 %v1328
  %1887 = vmatpush1.bf16.msra.mxu0 %v1327
  %1888 = vmatprep.subr.bf16.mxu0 %v1330
  %1889 = vmatpush1.bf16.msra.mxu0 %v1329
  %1890 = vmatprep.subr.bf16.mxu0 %v1332
  %1891 = vmatpush1.bf16.msra.mxu0 %v1331
  %1892 = vmatprep.subr.bf16.mxu0 %v1334
  %1893 = vmatpush1.bf16.msra.mxu0 %v1333
  %1894 = vmatprep.subr.bf16.mxu0 %v1336
  %1895 = vmatpush1.bf16.msra.mxu0 %v1335
  %1896 = vmatprep.mubr.bf16.mxu0 %v622
  %1897 = vmatmul.mubr.bf16.gmra.mrb[0].mxu0 %v621
  %v1898 = vpop.f32.mrb[0].mxu0
  %v1899 = vadd.f32 %v1746, %v1898
  %v1900 = vpop.f32.mrb[0].mxu0
  %v1901 = vadd.f32 %v1748, %v1900
  %v1902 = vpop.f32.mrb[0].mxu0
  %v1903 = vadd.f32 %v1750, %v1902
  %v1904 = vpop.f32.mrb[0].mxu0
  %v1905 = vadd.f32 %v1752, %v1904
  %1906 = vmatprep.mubr.bf16.mxu0 %v631
  %1907 = vmatmul.mubr.bf16.gmra.mrb[0].mxu0 %v630
  %v1908 = vpop.f32.mrb[0].mxu0
  %v1909 = vadd.f32 %v1756, %v1908
  %v1910 = vpop.f32.mrb[0].mxu0
  %v1911 = vadd.f32 %v1758, %v1910
  %v1912 = vpop.f32.mrb[0].mxu0
  %v1913 = vadd.f32 %v1760, %v1912
  %v1914 = vpop.f32.mrb[0].mxu0
  %v1915 = vadd.f32 %v1762, %v1914
  %1916 = vmatprep.mubr.bf16.mxu0 %v640
  %1917 = vmatmul.mubr.bf16.gmra.mrb[0].mxu0 %v639
  %v1918 = vpop.f32.mrb[0].mxu0
  %v1919 = vadd.f32 %v1766, %v1918
  %v1920 = vpop.f32.mrb[0].mxu0
  %v1921 = vadd.f32 %v1768, %v1920
  %v1922 = vpop.f32.mrb[0].mxu0
  %v1923 = vadd.f32 %v1770, %v1922
  %v1924 = vpop.f32.mrb[0].mxu0
  %v1925 = vadd.f32 %v1772, %v1924
  %1926 = vmatprep.mubr.bf16.mxu0 %v649
  %1927 = vmatmul.mubr.bf16.gmra.mrb[0].mxu0 %v648
  %v1928 = vpop.f32.mrb[0].mxu0
  %v1929 = vadd.f32 %v1776, %v1928
  %v1930 = vpop.f32.mrb[0].mxu0
  %v1931 = vadd.f32 %v1778, %v1930
  %v1932 = vpop.f32.mrb[0].mxu0
  %v1933 = vadd.f32 %v1780, %v1932
  %v1934 = vpop.f32.mrb[0].mxu0
  %v1935 = vadd.f32 %v1782, %v1934
  %1936 = vmatprep.mubr.bf16.mxu0 %v658
  %1937 = vmatmul.mubr.bf16.gmra.mrb[0].mxu0 %v657
  %v1938 = vpop.f32.mrb[0].mxu0
  %v1939 = vadd.f32 %v1786, %v1938
  %v1940 = vpop.f32.mrb[0].mxu0
  %v1941 = vadd.f32 %v1788, %v1940
  %v1942 = vpop.f32.mrb[0].mxu0
  %v1943 = vadd.f32 %v1790, %v1942
  %v1944 = vpop.f32.mrb[0].mxu0
  %v1945 = vadd.f32 %v1792, %v1944
  %1946 = vmatprep.mubr.bf16.mxu0 %v667
  %1947 = vmatmul.mubr.bf16.gmra.mrb[0].mxu0 %v666
  %v1948 = vpop.f32.mrb[0].mxu0
  %v1949 = vadd.f32 %v1796, %v1948
  %v1950 = vpop.f32.mrb[0].mxu0
  %v1951 = vadd.f32 %v1798, %v1950
  %v1952 = vpop.f32.mrb[0].mxu0
  %v1953 = vadd.f32 %v1800, %v1952
  %v1954 = vpop.f32.mrb[0].mxu0
  %v1955 = vadd.f32 %v1802, %v1954
  %1956 = vmatprep.mubr.bf16.mxu0 %v676
  %1957 = vmatmul.mubr.bf16.gmra.mrb[0].mxu0 %v675
  %v1958 = vpop.f32.mrb[0].mxu0
  %v1959 = vadd.f32 %v1806, %v1958
  %v1960 = vpop.f32.mrb[0].mxu0
  %v1961 = vadd.f32 %v1808, %v1960
  %v1962 = vpop.f32.mrb[0].mxu0
  %v1963 = vadd.f32 %v1810, %v1962
  %v1964 = vpop.f32.mrb[0].mxu0
  %v1965 = vadd.f32 %v1812, %v1964
  %1966 = vmatprep.mubr.bf16.mxu0 %v685
  %1967 = vmatmul.mubr.bf16.gmra.mrb[0].mxu0 %v684
  %v1968 = vpop.f32.mrb[0].mxu0
  %v1969 = vadd.f32 %v1816, %v1968
  %v1970 = vpop.f32.mrb[0].mxu0
  %v1971 = vadd.f32 %v1818, %v1970
  %v1972 = vpop.f32.mrb[0].mxu0
  %v1973 = vadd.f32 %v1820, %v1972
  %v1974 = vpop.f32.mrb[0].mxu0
  %v1975 = vadd.f32 %v1822, %v1974
  %1976 = vmatprep.mubr.bf16.mxu0 %v694
  %1977 = vmatmul.mubr.bf16.gmra.mrb[0].mxu0 %v693
  %v1978 = vpop.f32.mrb[0].mxu0
  %v1979 = vadd.f32 %v1826, %v1978
  %v1980 = vpop.f32.mrb[0].mxu0
  %v1981 = vadd.f32 %v1828, %v1980
  %v1982 = vpop.f32.mrb[0].mxu0
  %v1983 = vadd.f32 %v1830, %v1982
  %v1984 = vpop.f32.mrb[0].mxu0
  %v1985 = vadd.f32 %v1832, %v1984
  %1986 = vmatprep.mubr.bf16.mxu0 %v703
  %1987 = vmatmul.mubr.bf16.gmra.mrb[0].mxu0 %v702
  %v1988 = vpop.f32.mrb[0].mxu0
  %v1989 = vadd.f32 %v1836, %v1988
  %v1990 = vpop.f32.mrb[0].mxu0
  %v1991 = vadd.f32 %v1838, %v1990
  %v1992 = vpop.f32.mrb[0].mxu0
  %v1993 = vadd.f32 %v1840, %v1992
  %v1994 = vpop.f32.mrb[0].mxu0
  %v1995 = vadd.f32 %v1842, %v1994
  %1996 = vmatprep.mubr.bf16.mxu0 %v712
  %1997 = vmatmul.mubr.bf16.gmra.mrb[0].mxu0 %v711
  %v1998 = vpop.f32.mrb[0].mxu0
  %v1999 = vadd.f32 %v1846, %v1998
  %v2000 = vpop.f32.mrb[0].mxu0
  %v2001 = vadd.f32 %v1848, %v2000
  %v2002 = vpop.f32.mrb[0].mxu0
  %v2003 = vadd.f32 %v1850, %v2002
  %v2004 = vpop.f32.mrb[0].mxu0
  %v2005 = vadd.f32 %v1852, %v2004
  %2006 = vmatprep.mubr.bf16.mxu0 %v721
  %2007 = vmatmul.mubr.bf16.gmra.mrb[0].mxu0 %v720
  %v2008 = vpop.f32.mrb[0].mxu0
  %v2009 = vadd.f32 %v1856, %v2008
  %v2010 = vpop.f32.mrb[0].mxu0
  %v2011 = vadd.f32 %v1858, %v2010
  %v2012 = vpop.f32.mrb[0].mxu0
  %v2013 = vadd.f32 %v1860, %v2012
  %v2014 = vpop.f32.mrb[0].mxu0
  %v2015 = vadd.f32 %v1862, %v2014
  %2016 = vdwg.mxu0
  %2017 = vmatprep.subr.bf16.mxu0 %v1338
  %2018 = vmatpush1.bf16.msra.mxu0 %v1337
  %2019 = vmatprep.subr.bf16.mxu0 %v1340
  %2020 = vmatpush1.bf16.msra.mxu0 %v1339
  %2021 = vmatprep.subr.bf16.mxu0 %v1342
  %2022 = vmatpush1.bf16.msra.mxu0 %v1341
  %2023 = vmatprep.subr.bf16.mxu0 %v1344
  %2024 = vmatpush1.bf16.msra.mxu0 %v1343
  %2025 = vmatprep.subr.bf16.mxu0 %v1346
  %2026 = vmatpush1.bf16.msra.mxu0 %v1345
  %2027 = vmatprep.subr.bf16.mxu0 %v1348
  %2028 = vmatpush1.bf16.msra.mxu0 %v1347
  %2029 = vmatprep.subr.bf16.mxu0 %v1350
  %2030 = vmatpush1.bf16.msra.mxu0 %v1349
  %2031 = vmatprep.subr.bf16.mxu0 %v1352
  %2032 = vmatpush1.bf16.msra.mxu0 %v1351
  %2033 = vmatprep.subr.bf16.mxu0 %v1354
  %2034 = vmatpush1.bf16.msra.mxu0 %v1353
  %2035 = vmatprep.subr.bf16.mxu0 %v1356
  %2036 = vmatpush1.bf16.msra.mxu0 %v1355
  %2037 = vmatprep.subr.bf16.mxu0 %v1358
  %2038 = vmatpush1.bf16.msra.mxu0 %v1357
  %2039 = vmatprep.subr.bf16.mxu0 %v1360
  %2040 = vmatpush1.bf16.msra.mxu0 %v1359
  %2041 = vmatprep.subr.bf16.mxu0 %v1362
  %2042 = vmatpush1.bf16.msra.mxu0 %v1361
  %2043 = vmatprep.subr.bf16.mxu0 %v1364
  %2044 = vmatpush1.bf16.msra.mxu0 %v1363
  %2045 = vmatprep.subr.bf16.mxu0 %v1366
  %2046 = vmatpush1.bf16.msra.mxu0 %v1365
  %2047 = vmatprep.subr.bf16.mxu0 %v1368
  %2048 = vmatpush1.bf16.msra.mxu0 %v1367
  %2049 = vmatprep.mubr.bf16.mxu0 %v624
  %2050 = vmatmul.mubr.bf16.gmra.mrb[0].mxu0 %v623
  %v2051 = vpop.f32.mrb[0].mxu0
  %v2052 = vadd.f32 %v1899, %v2051
  %v2053 = vpop.f32.mrb[0].mxu0
  %v2054 = vadd.f32 %v1901, %v2053
  %v2055 = vpop.f32.mrb[0].mxu0
  %v2056 = vadd.f32 %v1903, %v2055
  %v2057 = vpop.f32.mrb[0].mxu0
  %v2058 = vadd.f32 %v1905, %v2057
  %2059 = vmatprep.mubr.bf16.mxu0 %v633
  %2060 = vmatmul.mubr.bf16.gmra.mrb[0].mxu0 %v632
  %v2061 = vpop.f32.mrb[0].mxu0
  %v2062 = vadd.f32 %v1909, %v2061
  %v2063 = vpop.f32.mrb[0].mxu0
  %v2064 = vadd.f32 %v1911, %v2063
  %v2065 = vpop.f32.mrb[0].mxu0
  %v2066 = vadd.f32 %v1913, %v2065
  %v2067 = vpop.f32.mrb[0].mxu0
  %v2068 = vadd.f32 %v1915, %v2067
  %2069 = vmatprep.mubr.bf16.mxu0 %v642
  %2070 = vmatmul.mubr.bf16.gmra.mrb[0].mxu0 %v641
  %v2071 = vpop.f32.mrb[0].mxu0
  %v2072 = vadd.f32 %v1919, %v2071
  %v2073 = vpop.f32.mrb[0].mxu0
  %v2074 = vadd.f32 %v1921, %v2073
  %v2075 = vpop.f32.mrb[0].mxu0
  %v2076 = vadd.f32 %v1923, %v2075
  %v2077 = vpop.f32.mrb[0].mxu0
  %v2078 = vadd.f32 %v1925, %v2077
  %2079 = vmatprep.mubr.bf16.mxu0 %v651
  %2080 = vmatmul.mubr.bf16.gmra.mrb[0].mxu0 %v650
  %v2081 = vpop.f32.mrb[0].mxu0
  %v2082 = vadd.f32 %v1929, %v2081
  %v2083 = vpop.f32.mrb[0].mxu0
  %v2084 = vadd.f32 %v1931, %v2083
  %v2085 = vpop.f32.mrb[0].mxu0
  %v2086 = vadd.f32 %v1933, %v2085
  %v2087 = vpop.f32.mrb[0].mxu0
  %v2088 = vadd.f32 %v1935, %v2087
  %2089 = vmatprep.mubr.bf16.mxu0 %v660
  %2090 = vmatmul.mubr.bf16.gmra.mrb[0].mxu0 %v659
  %v2091 = vpop.f32.mrb[0].mxu0
  %v2092 = vadd.f32 %v1939, %v2091
  %v2093 = vpop.f32.mrb[0].mxu0
  %v2094 = vadd.f32 %v1941, %v2093
  %v2095 = vpop.f32.mrb[0].mxu0
  %v2096 = vadd.f32 %v1943, %v2095
  %v2097 = vpop.f32.mrb[0].mxu0
  %v2098 = vadd.f32 %v1945, %v2097
  %2099 = vmatprep.mubr.bf16.mxu0 %v669
  %2100 = vmatmul.mubr.bf16.gmra.mrb[0].mxu0 %v668
  %v2101 = vpop.f32.mrb[0].mxu0
  %v2102 = vadd.f32 %v1949, %v2101
  %v2103 = vpop.f32.mrb[0].mxu0
  %v2104 = vadd.f32 %v1951, %v2103
  %v2105 = vpop.f32.mrb[0].mxu0
  %v2106 = vadd.f32 %v1953, %v2105
  %v2107 = vpop.f32.mrb[0].mxu0
  %v2108 = vadd.f32 %v1955, %v2107
  %2109 = vmatprep.mubr.bf16.mxu0 %v678
  %2110 = vmatmul.mubr.bf16.gmra.mrb[0].mxu0 %v677
  %v2111 = vpop.f32.mrb[0].mxu0
  %v2112 = vadd.f32 %v1959, %v2111
  %v2113 = vpop.f32.mrb[0].mxu0
  %v2114 = vadd.f32 %v1961, %v2113
  %v2115 = vpop.f32.mrb[0].mxu0
  %v2116 = vadd.f32 %v1963, %v2115
  %v2117 = vpop.f32.mrb[0].mxu0
  %v2118 = vadd.f32 %v1965, %v2117
  %2119 = vmatprep.mubr.bf16.mxu0 %v687
  %2120 = vmatmul.mubr.bf16.gmra.mrb[0].mxu0 %v686
  %v2121 = vpop.f32.mrb[0].mxu0
  %v2122 = vadd.f32 %v1969, %v2121
  %v2123 = vpop.f32.mrb[0].mxu0
  %v2124 = vadd.f32 %v1971, %v2123
  %v2125 = vpop.f32.mrb[0].mxu0
  %v2126 = vadd.f32 %v1973, %v2125
  %v2127 = vpop.f32.mrb[0].mxu0
  %v2128 = vadd.f32 %v1975, %v2127
  %2129 = vmatprep.mubr.bf16.mxu0 %v696
  %2130 = vmatmul.mubr.bf16.gmra.mrb[0].mxu0 %v695
  %v2131 = vpop.f32.mrb[0].mxu0
  %v2132 = vadd.f32 %v1979, %v2131
  %v2133 = vpop.f32.mrb[0].mxu0
  %v2134 = vadd.f32 %v1981, %v2133
  %v2135 = vpop.f32.mrb[0].mxu0
  %v2136 = vadd.f32 %v1983, %v2135
  %v2137 = vpop.f32.mrb[0].mxu0
  %v2138 = vadd.f32 %v1985, %v2137
  %2139 = vmatprep.mubr.bf16.mxu0 %v705
  %2140 = vmatmul.mubr.bf16.gmra.mrb[0].mxu0 %v704
  %v2141 = vpop.f32.mrb[0].mxu0
  %v2142 = vadd.f32 %v1989, %v2141
  %v2143 = vpop.f32.mrb[0].mxu0
  %v2144 = vadd.f32 %v1991, %v2143
  %v2145 = vpop.f32.mrb[0].mxu0
  %v2146 = vadd.f32 %v1993, %v2145
  %v2147 = vpop.f32.mrb[0].mxu0
  %v2148 = vadd.f32 %v1995, %v2147
  %2149 = vmatprep.mubr.bf16.mxu0 %v714
  %2150 = vmatmul.mubr.bf16.gmra.mrb[0].mxu0 %v713
  %v2151 = vpop.f32.mrb[0].mxu0
  %v2152 = vadd.f32 %v1999, %v2151
  %v2153 = vpop.f32.mrb[0].mxu0
  %v2154 = vadd.f32 %v2001, %v2153
  %v2155 = vpop.f32.mrb[0].mxu0
  %v2156 = vadd.f32 %v2003, %v2155
  %v2157 = vpop.f32.mrb[0].mxu0
  %v2158 = vadd.f32 %v2005, %v2157
  %2159 = vmatprep.mubr.bf16.mxu0 %v723
  %2160 = vmatmul.mubr.bf16.gmra.mrb[0].mxu0 %v722
  %v2161 = vpop.f32.mrb[0].mxu0
  %v2162 = vadd.f32 %v2009, %v2161
  %v2163 = vpop.f32.mrb[0].mxu0
  %v2164 = vadd.f32 %v2011, %v2163
  %v2165 = vpop.f32.mrb[0].mxu0
  %v2166 = vadd.f32 %v2013, %v2165
  %v2167 = vpop.f32.mrb[0].mxu0
  %v2168 = vadd.f32 %v2015, %v2167
  %2169 = vdwg.mxu0
  %2170 = vmatprep.subr.bf16.mxu0 %v1370
  %2171 = vmatpush1.bf16.msra.mxu0 %v1369
  %2172 = vmatprep.subr.bf16.mxu0 %v1372
  %2173 = vmatpush1.bf16.msra.mxu0 %v1371
  %2174 = vmatprep.subr.bf16.mxu0 %v1374
  %2175 = vmatpush1.bf16.msra.mxu0 %v1373
  %2176 = vmatprep.subr.bf16.mxu0 %v1376
  %2177 = vmatpush1.bf16.msra.mxu0 %v1375
  %2178 = vmatprep.subr.bf16.mxu0 %v1378
  %2179 = vmatpush1.bf16.msra.mxu0 %v1377
  %2180 = vmatprep.subr.bf16.mxu0 %v1380
  %2181 = vmatpush1.bf16.msra.mxu0 %v1379
  %2182 = vmatprep.subr.bf16.mxu0 0
  %2183 = vmatpush1.bf16.msra.mxu0 0
  %2184 = vmatprep.subr.bf16.mxu0 0
  %2185 = vmatpush1.bf16.msra.mxu0 0
  %2186 = vmatprep.subr.bf16.mxu0 0
  %2187 = vmatpush1.bf16.msra.mxu0 0
  %2188 = vmatprep.subr.bf16.mxu0 0
  %2189 = vmatpush1.bf16.msra.mxu0 0
  %2190 = vmatprep.subr.bf16.mxu0 0
  %2191 = vmatpush1.bf16.msra.mxu0 0
  %2192 = vmatprep.subr.bf16.mxu0 0
  %2193 = vmatpush1.bf16.msra.mxu0 0
  %2194 = vmatprep.subr.bf16.mxu0 0
  %2195 = vmatpush1.bf16.msra.mxu0 0
  %2196 = vmatprep.subr.bf16.mxu0 0
  %2197 = vmatpush1.bf16.msra.mxu0 0
  %2198 = vmatprep.subr.bf16.mxu0 0
  %2199 = vmatpush1.bf16.msra.mxu0 0
  %2200 = vmatprep.subr.bf16.mxu0 0
  %2201 = vmatpush1.bf16.msra.mxu0 0
  %2202 = vmatprep.mubr.bf16.mxu0 0
  %2203 = vmatmul.mubr.bf16.gmra.mrb[0].mxu0 %v1523
  %v2204 = vpop.f32.mrb[0].mxu0
  %v2205 = vadd.f32 %v2052, %v2204
  %v2206 = vpop.f32.mrb[0].mxu0
  %v2207 = vadd.f32 %v2054, %v2206
  %v2208 = vpop.f32.mrb[0].mxu0
  %v2209 = vadd.f32 %v2056, %v2208
  %v2210 = vpop.f32.mrb[0].mxu0
  %v2211 = vadd.f32 %v2058, %v2210
  %2212 = vmatprep.mubr.bf16.mxu0 0
  %2213 = vmatmul.mubr.bf16.gmra.mrb[0].mxu0 %v1526
  %v2214 = vpop.f32.mrb[0].mxu0
  %v2215 = vadd.f32 %v2062, %v2214
  %v2216 = vpop.f32.mrb[0].mxu0
  %v2217 = vadd.f32 %v2064, %v2216
  %v2218 = vpop.f32.mrb[0].mxu0
  %v2219 = vadd.f32 %v2066, %v2218
  %v2220 = vpop.f32.mrb[0].mxu0
  %v2221 = vadd.f32 %v2068, %v2220
  %2222 = vmatprep.mubr.bf16.mxu0 0
  %2223 = vmatmul.mubr.bf16.gmra.mrb[0].mxu0 %v1529
  %v2224 = vpop.f32.mrb[0].mxu0
  %v2225 = vadd.f32 %v2072, %v2224
  %v2226 = vpop.f32.mrb[0].mxu0
  %v2227 = vadd.f32 %v2074, %v2226
  %v2228 = vpop.f32.mrb[0].mxu0
  %v2229 = vadd.f32 %v2076, %v2228
  %v2230 = vpop.f32.mrb[0].mxu0
  %v2231 = vadd.f32 %v2078, %v2230
  %2232 = vmatprep.mubr.bf16.mxu0 0
  %2233 = vmatmul.mubr.bf16.gmra.mrb[0].mxu0 %v1532
  %v2234 = vpop.f32.mrb[0].mxu0
  %v2235 = vadd.f32 %v2082, %v2234
  %v2236 = vpop.f32.mrb[0].mxu0
  %v2237 = vadd.f32 %v2084, %v2236
  %v2238 = vpop.f32.mrb[0].mxu0
  %v2239 = vadd.f32 %v2086, %v2238
  %v2240 = vpop.f32.mrb[0].mxu0
  %v2241 = vadd.f32 %v2088, %v2240
  %2242 = vmatprep.mubr.bf16.mxu0 0
  %2243 = vmatmul.mubr.bf16.gmra.mrb[0].mxu0 %v1535
  %v2244 = vpop.f32.mrb[0].mxu0
  %v2245 = vadd.f32 %v2092, %v2244
  %v2246 = vpop.f32.mrb[0].mxu0
  %v2247 = vadd.f32 %v2094, %v2246
  %v2248 = vpop.f32.mrb[0].mxu0
  %v2249 = vadd.f32 %v2096, %v2248
  %v2250 = vpop.f32.mrb[0].mxu0
  %v2251 = vadd.f32 %v2098, %v2250
  %2252 = vmatprep.mubr.bf16.mxu0 0
  %2253 = vmatmul.mubr.bf16.gmra.mrb[0].mxu0 %v1538
  %v2254 = vpop.f32.mrb[0].mxu0
  %v2255 = vadd.f32 %v2102, %v2254
  %v2256 = vpop.f32.mrb[0].mxu0
  %v2257 = vadd.f32 %v2104, %v2256
  %v2258 = vpop.f32.mrb[0].mxu0
  %v2259 = vadd.f32 %v2106, %v2258
  %v2260 = vpop.f32.mrb[0].mxu0
  %v2261 = vadd.f32 %v2108, %v2260
  %2262 = vmatprep.mubr.bf16.mxu0 0
  %2263 = vmatmul.mubr.bf16.gmra.mrb[0].mxu0 %v1541
  %v2264 = vpop.f32.mrb[0].mxu0
  %v2265 = vadd.f32 %v2112, %v2264
  %v2266 = vpop.f32.mrb[0].mxu0
  %v2267 = vadd.f32 %v2114, %v2266
  %v2268 = vpop.f32.mrb[0].mxu0
  %v2269 = vadd.f32 %v2116, %v2268
  %v2270 = vpop.f32.mrb[0].mxu0
  %v2271 = vadd.f32 %v2118, %v2270
  %2272 = vmatprep.mubr.bf16.mxu0 0
  %2273 = vmatmul.mubr.bf16.gmra.mrb[0].mxu0 %v1544
  %v2274 = vpop.f32.mrb[0].mxu0
  %v2275 = vadd.f32 %v2122, %v2274
  %v2276 = vpop.f32.mrb[0].mxu0
  %v2277 = vadd.f32 %v2124, %v2276
  %v2278 = vpop.f32.mrb[0].mxu0
  %v2279 = vadd.f32 %v2126, %v2278
  %v2280 = vpop.f32.mrb[0].mxu0
  %v2281 = vadd.f32 %v2128, %v2280
  %2282 = vmatprep.mubr.bf16.mxu0 0
  %2283 = vmatmul.mubr.bf16.gmra.mrb[0].mxu0 %v1547
  %v2284 = vpop.f32.mrb[0].mxu0
  %v2285 = vadd.f32 %v2132, %v2284
  %v2286 = vpop.f32.mrb[0].mxu0
  %v2287 = vadd.f32 %v2134, %v2286
  %v2288 = vpop.f32.mrb[0].mxu0
  %v2289 = vadd.f32 %v2136, %v2288
  %v2290 = vpop.f32.mrb[0].mxu0
  %v2291 = vadd.f32 %v2138, %v2290
  %2292 = vmatprep.mubr.bf16.mxu0 0
  %2293 = vmatmul.mubr.bf16.gmra.mrb[0].mxu0 %v1550
  %v2294 = vpop.f32.mrb[0].mxu0
  %v2295 = vadd.f32 %v2142, %v2294
  %v2296 = vpop.f32.mrb[0].mxu0
  %v2297 = vadd.f32 %v2144, %v2296
  %v2298 = vpop.f32.mrb[0].mxu0
  %v2299 = vadd.f32 %v2146, %v2298
  %v2300 = vpop.f32.mrb[0].mxu0
  %v2301 = vadd.f32 %v2148, %v2300
  %2302 = vmatprep.mubr.bf16.mxu0 0
  %2303 = vmatmul.mubr.bf16.gmra.mrb[0].mxu0 %v1553
  %v2304 = vpop.f32.mrb[0].mxu0
  %v2305 = vadd.f32 %v2152, %v2304
  %v2306 = vpop.f32.mrb[0].mxu0
  %v2307 = vadd.f32 %v2154, %v2306
  %v2308 = vpop.f32.mrb[0].mxu0
  %v2309 = vadd.f32 %v2156, %v2308
  %v2310 = vpop.f32.mrb[0].mxu0
  %v2311 = vadd.f32 %v2158, %v2310
  %2312 = vmatprep.mubr.bf16.mxu0 0
  %2313 = vmatmul.mubr.bf16.gmra.mrb[0].mxu0 %v1556
  %v2314 = vpop.f32.mrb[0].mxu0
  %v2315 = vadd.f32 %v2162, %v2314
  %v2316 = vpop.f32.mrb[0].mxu0
  %v2317 = vadd.f32 %v2164, %v2316
  %v2318 = vpop.f32.mrb[0].mxu0
  %v2319 = vadd.f32 %v2166, %v2318
  %v2320 = vpop.f32.mrb[0].mxu0
  %v2321 = vadd.f32 %v2168, %v2320
  %2322 = vdwg.mxu0
  %v2323 = vld [vmem:[%s4] sm:$0xff]
  %v2324 = vld [vmem:[%s4 + $0x8] sm:$0xff]
  %v2325 = vld [vmem:[%s4 + $0x10] sm:$0xff]
  %v2326 = vld [vmem:[%s4 + $0x18] sm:$0xff]
  %v2327 = vld [vmem:[%s4 + $0x20] sm:$0xff]
  %v2328 = vld [vmem:[%s4 + $0x28] sm:$0xff]
  %v2329 = vld [vmem:[%s4 + $0x30] sm:$0xff]
  %v2330 = vld [vmem:[%s4 + $0x38] sm:$0xff]
  %v2331 = vld [vmem:[%s4 + $0x40] sm:$0xff]
  %v2332 = vld [vmem:[%s4 + $0x48] sm:$0xff]
  %v2333 = vld [vmem:[%s4 + $0x50] sm:$0xff]
  %v2334 = vld [vmem:[%s4 + $0x58] sm:$0xff]
  %v2335 = vld [vmem:[%s4 + $0x60] sm:$0xff]
  %v2336 = vld [vmem:[%s4 + $0x68] sm:$0xff]
  %v2337 = vld [vmem:[%s4 + $0x70] sm:$0xff]
  %v2338 = vld [vmem:[%s4 + $0x78] sm:$0xff]
  %v2339 = vld [vmem:[%s4 + $0x80] sm:$0xff]
  %v2340 = vld [vmem:[%s4 + $0x88] sm:$0xff]
  %v2341 = vld [vmem:[%s4 + $0x90] sm:$0xff]
  %v2342 = vld [vmem:[%s4 + $0x98] sm:$0xff]
  %v2343 = vld [vmem:[%s4 + $0xa0] sm:$0xff]
  %v2344 = vld [vmem:[%s4 + $0xa8] sm:$0xff]
  %v2345 = vld [vmem:[%s4 + $0xb0] sm:$0xff]
  %v2346 = vld [vmem:[%s4 + $0xb8] sm:$0xff]
  %v2347 = vld [vmem:[%s4 + $0xc0] sm:$0xff]
  %v2348 = vld [vmem:[%s4 + $0xc8] sm:$0xff]
  %v2349 = vld [vmem:[%s4 + $0xd0] sm:$0xff]
  %v2350 = vld [vmem:[%s4 + $0xd8] sm:$0xff]
  %v2351 = vld [vmem:[%s4 + $0xe0] sm:$0xff]
  %v2352 = vld [vmem:[%s4 + $0xe8] sm:$0xff]
  %v2353 = vld [vmem:[%s4 + $0xf0] sm:$0xff]
  %v2354 = vld [vmem:[%s4 + $0xf8] sm:$0xff]
  %2355 = vmatprep.subr.mxu0 0.0
  %2356 = vmatpush1.msra.mxu0 %v2323
  %2357 = vmatprep.subr.mxu0 0.0
  %2358 = vmatpush1.msra.mxu0 %v2324
  %2359 = vmatprep.subr.mxu0 0.0
  %2360 = vmatpush1.msra.mxu0 %v2325
  %2361 = vmatprep.subr.mxu0 0.0
  %2362 = vmatpush1.msra.mxu0 %v2326
  %2363 = vmatprep.subr.mxu0 0.0
  %2364 = vmatpush1.msra.mxu0 %v2327
  %2365 = vmatprep.subr.mxu0 0.0
  %2366 = vmatpush1.msra.mxu0 %v2328
  %2367 = vmatprep.subr.mxu0 0.0
  %2368 = vmatpush1.msra.mxu0 %v2329
  %2369 = vmatprep.subr.mxu0 0.0
  %2370 = vmatpush1.msra.mxu0 %v2330
  %2371 = vmatprep.subr.mxu0 0.0
  %2372 = vmatpush1.msra.mxu0 %v2331
  %2373 = vmatprep.subr.mxu0 0.0
  %2374 = vmatpush1.msra.mxu0 %v2332
  %2375 = vmatprep.subr.mxu0 0.0
  %2376 = vmatpush1.msra.mxu0 %v2333
  %2377 = vmatprep.subr.mxu0 0.0
  %2378 = vmatpush1.msra.mxu0 %v2334
  %2379 = vmatprep.subr.mxu0 0.0
  %2380 = vmatpush1.msra.mxu0 %v2335
  %2381 = vmatprep.subr.mxu0 0.0
  %2382 = vmatpush1.msra.mxu0 %v2336
  %2383 = vmatprep.subr.mxu0 0.0
  %2384 = vmatpush1.msra.mxu0 %v2337
  %2385 = vmatprep.subr.mxu0 0.0
  %2386 = vmatpush1.msra.mxu0 %v2338
  %2387 = vmatprep.subr.mxu0 0.0
  %2388 = vmatpush1.msra.mxu0 %v2339
  %2389 = vmatprep.subr.mxu0 0.0
  %2390 = vmatpush1.msra.mxu0 %v2340
  %2391 = vmatprep.subr.mxu0 0.0
  %2392 = vmatpush1.msra.mxu0 %v2341
  %2393 = vmatprep.subr.mxu0 0.0
  %2394 = vmatpush1.msra.mxu0 %v2342
  %2395 = vmatprep.subr.mxu0 0.0
  %2396 = vmatpush1.msra.mxu0 %v2343
  %2397 = vmatprep.subr.mxu0 0.0
  %2398 = vmatpush1.msra.mxu0 %v2344
  %2399 = vmatprep.subr.mxu0 0.0
  %2400 = vmatpush1.msra.mxu0 %v2345
  %2401 = vmatprep.subr.mxu0 0.0
  %2402 = vmatpush1.msra.mxu0 %v2346
  %2403 = vmatprep.subr.mxu0 0.0
  %2404 = vmatpush1.msra.mxu0 %v2347
  %2405 = vmatprep.subr.mxu0 0.0
  %2406 = vmatpush1.msra.mxu0 %v2348
  %2407 = vmatprep.subr.mxu0 0.0
  %2408 = vmatpush1.msra.mxu0 %v2349
  %2409 = vmatprep.subr.mxu0 0.0
  %2410 = vmatpush1.msra.mxu0 %v2350
  %2411 = vmatprep.subr.mxu0 0.0
  %2412 = vmatpush1.msra.mxu0 %v2351
  %2413 = vmatprep.subr.mxu0 0.0
  %2414 = vmatpush1.msra.mxu0 %v2352
  %2415 = vmatprep.subr.mxu0 0.0
  %2416 = vmatpush1.msra.mxu0 %v2353
  %2417 = vmatprep.subr.mxu0 0.0
  %2418 = vmatpush1.msra.mxu0 %v2354
  %2419 = vmatprep.mubr.f32.mxu0 %v2207
  %2420 = vmatmul.mubr.f32.gmra.mrb[0].mxu0 %v2205
  %v2421 = vpop.f32.mrb[0].mxu0
  %v2422 = vadd.f32 0.0, %v2421
  %v2423 = vpop.f32.mrb[0].mxu0
  %2424 = vmatprep.mubr.f32.mxu0 %v2211
  %2425 = vmatmul.mubr.f32.gmra.mrb[0].mxu0 %v2209
  %v2426 = vpop.f32.mrb[0].mxu0
  %v2427 = vadd.f32 0.0, %v2426
  %v2428 = vpop.f32.mrb[0].mxu0
  %2429 = vmatprep.mubr.f32.mxu0 %v2217
  %2430 = vmatmul.mubr.f32.gmra.mrb[0].mxu0 %v2215
  %v2431 = vpop.f32.mrb[0].mxu0
  %v2432 = vadd.f32 0.0, %v2431
  %v2433 = vpop.f32.mrb[0].mxu0
  %2434 = vmatprep.mubr.f32.mxu0 %v2221
  %2435 = vmatmul.mubr.f32.gmra.mrb[0].mxu0 %v2219
  %v2436 = vpop.f32.mrb[0].mxu0
  %v2437 = vadd.f32 0.0, %v2436
  %v2438 = vpop.f32.mrb[0].mxu0
  %2439 = vmatprep.mubr.f32.mxu0 %v2227
  %2440 = vmatmul.mubr.f32.gmra.mrb[0].mxu0 %v2225
  %v2441 = vpop.f32.mrb[0].mxu0
  %v2442 = vadd.f32 0.0, %v2441
  %v2443 = vpop.f32.mrb[0].mxu0
  %2444 = vmatprep.mubr.f32.mxu0 %v2231
  %2445 = vmatmul.mubr.f32.gmra.mrb[0].mxu0 %v2229
  %v2446 = vpop.f32.mrb[0].mxu0
  %v2447 = vadd.f32 0.0, %v2446
  %v2448 = vpop.f32.mrb[0].mxu0
  %2449 = vmatprep.mubr.f32.mxu0 %v2237
  %2450 = vmatmul.mubr.f32.gmra.mrb[0].mxu0 %v2235
  %v2451 = vpop.f32.mrb[0].mxu0
  %v2452 = vadd.f32 0.0, %v2451
  %v2453 = vpop.f32.mrb[0].mxu0
  %2454 = vmatprep.mubr.f32.mxu0 %v2241
  %2455 = vmatmul.mubr.f32.gmra.mrb[0].mxu0 %v2239
  %v2456 = vpop.f32.mrb[0].mxu0
  %v2457 = vadd.f32 0.0, %v2456
  %v2458 = vpop.f32.mrb[0].mxu0
  %2459 = vmatprep.mubr.f32.mxu0 %v2247
  %2460 = vmatmul.mubr.f32.gmra.mrb[0].mxu0 %v2245
  %v2461 = vpop.f32.mrb[0].mxu0
  %v2462 = vadd.f32 0.0, %v2461
  %v2463 = vpop.f32.mrb[0].mxu0
  %2464 = vmatprep.mubr.f32.mxu0 %v2251
  %2465 = vmatmul.mubr.f32.gmra.mrb[0].mxu0 %v2249
  %v2466 = vpop.f32.mrb[0].mxu0
  %v2467 = vadd.f32 0.0, %v2466
  %v2468 = vpop.f32.mrb[0].mxu0
  %2469 = vmatprep.mubr.f32.mxu0 %v2257
  %2470 = vmatmul.mubr.f32.gmra.mrb[0].mxu0 %v2255
  %v2471 = vpop.f32.mrb[0].mxu0
  %v2472 = vadd.f32 0.0, %v2471
  %v2473 = vpop.f32.mrb[0].mxu0
  %2474 = vmatprep.mubr.f32.mxu0 %v2261
  %2475 = vmatmul.mubr.f32.gmra.mrb[0].mxu0 %v2259
  %v2476 = vpop.f32.mrb[0].mxu0
  %v2477 = vadd.f32 0.0, %v2476
  %v2478 = vpop.f32.mrb[0].mxu0
  %2479 = vmatprep.mubr.f32.mxu0 %v2267
  %2480 = vmatmul.mubr.f32.gmra.mrb[0].mxu0 %v2265
  %v2481 = vpop.f32.mrb[0].mxu0
  %v2482 = vadd.f32 0.0, %v2481
  %v2483 = vpop.f32.mrb[0].mxu0
  %2484 = vmatprep.mubr.f32.mxu0 %v2271
  %2485 = vmatmul.mubr.f32.gmra.mrb[0].mxu0 %v2269
  %v2486 = vpop.f32.mrb[0].mxu0
  %v2487 = vadd.f32 0.0, %v2486
  %v2488 = vpop.f32.mrb[0].mxu0
  %2489 = vmatprep.mubr.f32.mxu0 %v2277
  %2490 = vmatmul.mubr.f32.gmra.mrb[0].mxu0 %v2275
  %v2491 = vpop.f32.mrb[0].mxu0
  %v2492 = vadd.f32 0.0, %v2491
  %v2493 = vpop.f32.mrb[0].mxu0
  %2494 = vmatprep.mubr.f32.mxu0 %v2281
  %2495 = vmatmul.mubr.f32.gmra.mrb[0].mxu0 %v2279
  %v2496 = vpop.f32.mrb[0].mxu0
  %v2497 = vadd.f32 0.0, %v2496
  %v2498 = vpop.f32.mrb[0].mxu0
  %2499 = vmatprep.mubr.f32.mxu0 %v2287
  %2500 = vmatmul.mubr.f32.gmra.mrb[0].mxu0 %v2285
  %v2501 = vpop.f32.mrb[0].mxu0
  %v2502 = vadd.f32 0.0, %v2501
  %v2503 = vpop.f32.mrb[0].mxu0
  %2504 = vmatprep.mubr.f32.mxu0 %v2291
  %2505 = vmatmul.mubr.f32.gmra.mrb[0].mxu0 %v2289
  %v2506 = vpop.f32.mrb[0].mxu0
  %v2507 = vadd.f32 0.0, %v2506
  %v2508 = vpop.f32.mrb[0].mxu0
  %2509 = vmatprep.mubr.f32.mxu0 %v2297
  %2510 = vmatmul.mubr.f32.gmra.mrb[0].mxu0 %v2295
  %v2511 = vpop.f32.mrb[0].mxu0
  %v2512 = vadd.f32 0.0, %v2511
  %v2513 = vpop.f32.mrb[0].mxu0
  %2514 = vmatprep.mubr.f32.mxu0 %v2301
  %2515 = vmatmul.mubr.f32.gmra.mrb[0].mxu0 %v2299
  %v2516 = vpop.f32.mrb[0].mxu0
  %v2517 = vadd.f32 0.0, %v2516
  %v2518 = vpop.f32.mrb[0].mxu0
  %2519 = vmatprep.mubr.f32.mxu0 %v2307
  %2520 = vmatmul.mubr.f32.gmra.mrb[0].mxu0 %v2305
  %v2521 = vpop.f32.mrb[0].mxu0
  %v2522 = vadd.f32 0.0, %v2521
  %v2523 = vpop.f32.mrb[0].mxu0
  %2524 = vmatprep.mubr.f32.mxu0 %v2311
  %2525 = vmatmul.mubr.f32.gmra.mrb[0].mxu0 %v2309
  %v2526 = vpop.f32.mrb[0].mxu0
  %v2527 = vadd.f32 0.0, %v2526
  %v2528 = vpop.f32.mrb[0].mxu0
  %2529 = vmatprep.mubr.f32.mxu0 %v2317
  %2530 = vmatmul.mubr.f32.gmra.mrb[0].mxu0 %v2315
  %v2531 = vpop.f32.mrb[0].mxu0
  %v2532 = vadd.f32 0.0, %v2531
  %v2533 = vpop.f32.mrb[0].mxu0
  %2534 = vmatprep.mubr.f32.mxu0 %v2321
  %2535 = vmatmul.mubr.f32.gmra.mrb[0].mxu0 %v2319
  %v2536 = vpop.f32.mrb[0].mxu0
  %v2537 = vadd.f32 0.0, %v2536
  %v2538 = vpop.f32.mrb[0].mxu0
  %2539 = vdwg.mxu0
  %v2540 = vmul.f32 %v2205, %v2205
  %v2541 = vmul.f32 %v2207, %v2207
  %v2542 = vmul.f32 %v2209, %v2209
  %v2543 = vmul.f32 %v2211, %v2211
  %v2544 = vmul.f32 %v2215, %v2215
  %v2545 = vmul.f32 %v2217, %v2217
  %v2546 = vmul.f32 %v2219, %v2219
  %v2547 = vmul.f32 %v2221, %v2221
  %v2548 = vmul.f32 %v2225, %v2225
  %v2549 = vmul.f32 %v2227, %v2227
  %v2550 = vmul.f32 %v2229, %v2229
  %v2551 = vmul.f32 %v2231, %v2231
  %v2552 = vmul.f32 %v2235, %v2235
  %v2553 = vmul.f32 %v2237, %v2237
  %v2554 = vmul.f32 %v2239, %v2239
  %v2555 = vmul.f32 %v2241, %v2241
  %v2556 = vmul.f32 %v2245, %v2245
  %v2557 = vmul.f32 %v2247, %v2247
  %v2558 = vmul.f32 %v2249, %v2249
  %v2559 = vmul.f32 %v2251, %v2251
  %v2560 = vmul.f32 %v2255, %v2255
  %v2561 = vmul.f32 %v2257, %v2257
  %v2562 = vmul.f32 %v2259, %v2259
  %v2563 = vmul.f32 %v2261, %v2261
  %v2564 = vmul.f32 %v2265, %v2265
  %v2565 = vmul.f32 %v2267, %v2267
  %v2566 = vmul.f32 %v2269, %v2269
  %v2567 = vmul.f32 %v2271, %v2271
  %v2568 = vmul.f32 %v2275, %v2275
  %v2569 = vmul.f32 %v2277, %v2277
  %v2570 = vmul.f32 %v2279, %v2279
  %v2571 = vmul.f32 %v2281, %v2281
  %v2572 = vmul.f32 %v2285, %v2285
  %v2573 = vmul.f32 %v2287, %v2287
  %v2574 = vmul.f32 %v2289, %v2289
  %v2575 = vmul.f32 %v2291, %v2291
  %v2576 = vmul.f32 %v2295, %v2295
  %v2577 = vmul.f32 %v2297, %v2297
  %v2578 = vmul.f32 %v2299, %v2299
  %v2579 = vmul.f32 %v2301, %v2301
  %v2580 = vmul.f32 %v2305, %v2305
  %v2581 = vmul.f32 %v2307, %v2307
  %v2582 = vmul.f32 %v2309, %v2309
  %v2583 = vmul.f32 %v2311, %v2311
  %v2584 = vmul.f32 %v2315, %v2315
  %v2585 = vmul.f32 %v2317, %v2317
  %v2586 = vmul.f32 %v2319, %v2319
  %v2587 = vmul.f32 %v2321, %v2321
  %2588 = vmatprep.subr.mxu0 0.0
  %2589 = vmatpush1.msra.mxu0 %v2323
  %2590 = vmatprep.subr.mxu0 0.0
  %2591 = vmatpush1.msra.mxu0 %v2324
  %2592 = vmatprep.subr.mxu0 0.0
  %2593 = vmatpush1.msra.mxu0 %v2325
  %2594 = vmatprep.subr.mxu0 0.0
  %2595 = vmatpush1.msra.mxu0 %v2326
  %2596 = vmatprep.subr.mxu0 0.0
  %2597 = vmatpush1.msra.mxu0 %v2327
  %2598 = vmatprep.subr.mxu0 0.0
  %2599 = vmatpush1.msra.mxu0 %v2328
  %2600 = vmatprep.subr.mxu0 0.0
  %2601 = vmatpush1.msra.mxu0 %v2329
  %2602 = vmatprep.subr.mxu0 0.0
  %2603 = vmatpush1.msra.mxu0 %v2330
  %2604 = vmatprep.subr.mxu0 0.0
  %2605 = vmatpush1.msra.mxu0 %v2331
  %2606 = vmatprep.subr.mxu0 0.0
  %2607 = vmatpush1.msra.mxu0 %v2332
  %2608 = vmatprep.subr.mxu0 0.0
  %2609 = vmatpush1.msra.mxu0 %v2333
  %2610 = vmatprep.subr.mxu0 0.0
  %2611 = vmatpush1.msra.mxu0 %v2334
  %2612 = vmatprep.subr.mxu0 0.0
  %2613 = vmatpush1.msra.mxu0 %v2335
  %2614 = vmatprep.subr.mxu0 0.0
  %2615 = vmatpush1.msra.mxu0 %v2336
  %2616 = vmatprep.subr.mxu0 0.0
  %2617 = vmatpush1.msra.mxu0 %v2337
  %2618 = vmatprep.subr.mxu0 0.0
  %2619 = vmatpush1.msra.mxu0 %v2338
  %2620 = vmatprep.subr.mxu0 0.0
  %2621 = vmatpush1.msra.mxu0 %v2339
  %2622 = vmatprep.subr.mxu0 0.0
  %2623 = vmatpush1.msra.mxu0 %v2340
  %2624 = vmatprep.subr.mxu0 0.0
  %2625 = vmatpush1.msra.mxu0 %v2341
  %2626 = vmatprep.subr.mxu0 0.0
  %2627 = vmatpush1.msra.mxu0 %v2342
  %2628 = vmatprep.subr.mxu0 0.0
  %2629 = vmatpush1.msra.mxu0 %v2343
  %2630 = vmatprep.subr.mxu0 0.0
  %2631 = vmatpush1.msra.mxu0 %v2344
  %2632 = vmatprep.subr.mxu0 0.0
  %2633 = vmatpush1.msra.mxu0 %v2345
  %2634 = vmatprep.subr.mxu0 0.0
  %2635 = vmatpush1.msra.mxu0 %v2346
  %2636 = vmatprep.subr.mxu0 0.0
  %2637 = vmatpush1.msra.mxu0 %v2347
  %2638 = vmatprep.subr.mxu0 0.0
  %2639 = vmatpush1.msra.mxu0 %v2348
  %2640 = vmatprep.subr.mxu0 0.0
  %2641 = vmatpush1.msra.mxu0 %v2349
  %2642 = vmatprep.subr.mxu0 0.0
  %2643 = vmatpush1.msra.mxu0 %v2350
  %2644 = vmatprep.subr.mxu0 0.0
  %2645 = vmatpush1.msra.mxu0 %v2351
  %2646 = vmatprep.subr.mxu0 0.0
  %2647 = vmatpush1.msra.mxu0 %v2352
  %2648 = vmatprep.subr.mxu0 0.0
  %2649 = vmatpush1.msra.mxu0 %v2353
  %2650 = vmatprep.subr.mxu0 0.0
  %2651 = vmatpush1.msra.mxu0 %v2354
  %2652 = vmatprep.mubr.f32.mxu0 %v2541
  %2653 = vmatmul.mubr.f32.gmra.mrb[0].mxu0 %v2540
  %v2654 = vpop.f32.mrb[0].mxu0
  %v2655 = vadd.f32 0.0, %v2654
  %v2656 = vpop.f32.mrb[0].mxu0
  %2657 = vmatprep.mubr.f32.mxu0 %v2543
  %2658 = vmatmul.mubr.f32.gmra.mrb[0].mxu0 %v2542
  %v2659 = vpop.f32.mrb[0].mxu0
  %v2660 = vadd.f32 0.0, %v2659
  %v2661 = vpop.f32.mrb[0].mxu0
  %2662 = vmatprep.mubr.f32.mxu0 %v2545
  %2663 = vmatmul.mubr.f32.gmra.mrb[0].mxu0 %v2544
  %v2664 = vpop.f32.mrb[0].mxu0
  %v2665 = vadd.f32 0.0, %v2664
  %v2666 = vpop.f32.mrb[0].mxu0
  %2667 = vmatprep.mubr.f32.mxu0 %v2547
  %2668 = vmatmul.mubr.f32.gmra.mrb[0].mxu0 %v2546
  %v2669 = vpop.f32.mrb[0].mxu0
  %v2670 = vadd.f32 0.0, %v2669
  %v2671 = vpop.f32.mrb[0].mxu0
  %2672 = vmatprep.mubr.f32.mxu0 %v2549
  %2673 = vmatmul.mubr.f32.gmra.mrb[0].mxu0 %v2548
  %v2674 = vpop.f32.mrb[0].mxu0
  %v2675 = vadd.f32 0.0, %v2674
  %v2676 = vpop.f32.mrb[0].mxu0
  %2677 = vmatprep.mubr.f32.mxu0 %v2551
  %2678 = vmatmul.mubr.f32.gmra.mrb[0].mxu0 %v2550
  %v2679 = vpop.f32.mrb[0].mxu0
  %v2680 = vadd.f32 0.0, %v2679
  %v2681 = vpop.f32.mrb[0].mxu0
  %2682 = vmatprep.mubr.f32.mxu0 %v2553
  %2683 = vmatmul.mubr.f32.gmra.mrb[0].mxu0 %v2552
  %v2684 = vpop.f32.mrb[0].mxu0
  %v2685 = vadd.f32 0.0, %v2684
  %v2686 = vpop.f32.mrb[0].mxu0
  %2687 = vmatprep.mubr.f32.mxu0 %v2555
  %2688 = vmatmul.mubr.f32.gmra.mrb[0].mxu0 %v2554
  %v2689 = vpop.f32.mrb[0].mxu0
  %v2690 = vadd.f32 0.0, %v2689
  %v2691 = vpop.f32.mrb[0].mxu0
  %2692 = vmatprep.mubr.f32.mxu0 %v2557
  %2693 = vmatmul.mubr.f32.gmra.mrb[0].mxu0 %v2556
  %v2694 = vpop.f32.mrb[0].mxu0
  %v2695 = vadd.f32 0.0, %v2694
  %v2696 = vpop.f32.mrb[0].mxu0
  %2697 = vmatprep.mubr.f32.mxu0 %v2559
  %2698 = vmatmul.mubr.f32.gmra.mrb[0].mxu0 %v2558
  %v2699 = vpop.f32.mrb[0].mxu0
  %v2700 = vadd.f32 0.0, %v2699
  %v2701 = vpop.f32.mrb[0].mxu0
  %2702 = vmatprep.mubr.f32.mxu0 %v2561
  %2703 = vmatmul.mubr.f32.gmra.mrb[0].mxu0 %v2560
  %v2704 = vpop.f32.mrb[0].mxu0
  %v2705 = vadd.f32 0.0, %v2704
  %v2706 = vpop.f32.mrb[0].mxu0
  %2707 = vmatprep.mubr.f32.mxu0 %v2563
  %2708 = vmatmul.mubr.f32.gmra.mrb[0].mxu0 %v2562
  %v2709 = vpop.f32.mrb[0].mxu0
  %v2710 = vadd.f32 0.0, %v2709
  %v2711 = vpop.f32.mrb[0].mxu0
  %2712 = vmatprep.mubr.f32.mxu0 %v2565
  %2713 = vmatmul.mubr.f32.gmra.mrb[0].mxu0 %v2564
  %v2714 = vpop.f32.mrb[0].mxu0
  %v2715 = vadd.f32 0.0, %v2714
  %v2716 = vpop.f32.mrb[0].mxu0
  %2717 = vmatprep.mubr.f32.mxu0 %v2567
  %2718 = vmatmul.mubr.f32.gmra.mrb[0].mxu0 %v2566
  %v2719 = vpop.f32.mrb[0].mxu0
  %v2720 = vadd.f32 0.0, %v2719
  %v2721 = vpop.f32.mrb[0].mxu0
  %2722 = vmatprep.mubr.f32.mxu0 %v2569
  %2723 = vmatmul.mubr.f32.gmra.mrb[0].mxu0 %v2568
  %v2724 = vpop.f32.mrb[0].mxu0
  %v2725 = vadd.f32 0.0, %v2724
  %v2726 = vpop.f32.mrb[0].mxu0
  %2727 = vmatprep.mubr.f32.mxu0 %v2571
  %2728 = vmatmul.mubr.f32.gmra.mrb[0].mxu0 %v2570
  %v2729 = vpop.f32.mrb[0].mxu0
  %v2730 = vadd.f32 0.0, %v2729
  %v2731 = vpop.f32.mrb[0].mxu0
  %2732 = vmatprep.mubr.f32.mxu0 %v2573
  %2733 = vmatmul.mubr.f32.gmra.mrb[0].mxu0 %v2572
  %v2734 = vpop.f32.mrb[0].mxu0
  %v2735 = vadd.f32 0.0, %v2734
  %v2736 = vpop.f32.mrb[0].mxu0
  %2737 = vmatprep.mubr.f32.mxu0 %v2575
  %2738 = vmatmul.mubr.f32.gmra.mrb[0].mxu0 %v2574
  %v2739 = vpop.f32.mrb[0].mxu0
  %v2740 = vadd.f32 0.0, %v2739
  %v2741 = vpop.f32.mrb[0].mxu0
  %2742 = vmatprep.mubr.f32.mxu0 %v2577
  %2743 = vmatmul.mubr.f32.gmra.mrb[0].mxu0 %v2576
  %v2744 = vpop.f32.mrb[0].mxu0
  %v2745 = vadd.f32 0.0, %v2744
  %v2746 = vpop.f32.mrb[0].mxu0
  %2747 = vmatprep.mubr.f32.mxu0 %v2579
  %2748 = vmatmul.mubr.f32.gmra.mrb[0].mxu0 %v2578
  %v2749 = vpop.f32.mrb[0].mxu0
  %v2750 = vadd.f32 0.0, %v2749
  %v2751 = vpop.f32.mrb[0].mxu0
  %2752 = vmatprep.mubr.f32.mxu0 %v2581
  %2753 = vmatmul.mubr.f32.gmra.mrb[0].mxu0 %v2580
  %v2754 = vpop.f32.mrb[0].mxu0
  %v2755 = vadd.f32 0.0, %v2754
  %v2756 = vpop.f32.mrb[0].mxu0
  %2757 = vmatprep.mubr.f32.mxu0 %v2583
  %2758 = vmatmul.mubr.f32.gmra.mrb[0].mxu0 %v2582
  %v2759 = vpop.f32.mrb[0].mxu0
  %v2760 = vadd.f32 0.0, %v2759
  %v2761 = vpop.f32.mrb[0].mxu0
  %2762 = vmatprep.mubr.f32.mxu0 %v2585
  %2763 = vmatmul.mubr.f32.gmra.mrb[0].mxu0 %v2584
  %v2764 = vpop.f32.mrb[0].mxu0
  %v2765 = vadd.f32 0.0, %v2764
  %v2766 = vpop.f32.mrb[0].mxu0
  %2767 = vmatprep.mubr.f32.mxu0 %v2587
  %2768 = vmatmul.mubr.f32.gmra.mrb[0].mxu0 %v2586
  %v2769 = vpop.f32.mrb[0].mxu0
  %v2770 = vadd.f32 0.0, %v2769
  %v2771 = vpop.f32.mrb[0].mxu0
  %2772 = vdwg.mxu0
  %v2773 = vmul.f32 %v2422, 0.0069444445
  %v2774 = vmul.f32 %v2427, 0.0069444445
  %v2775 = vmul.f32 %v2432, 0.0069444445
  %v2776 = vmul.f32 %v2437, 0.0069444445
  %v2777 = vmul.f32 %v2442, 0.0069444445
  %v2778 = vmul.f32 %v2447, 0.0069444445
  %v2779 = vmul.f32 %v2452, 0.0069444445
  %v2780 = vmul.f32 %v2457, 0.0069444445
  %v2781 = vmul.f32 %v2462, 0.0069444445
  %v2782 = vmul.f32 %v2467, 0.0069444445
  %v2783 = vmul.f32 %v2472, 0.0069444445
  %v2784 = vmul.f32 %v2477, 0.0069444445
  %v2785 = vmul.f32 %v2482, 0.0069444445
  %v2786 = vmul.f32 %v2487, 0.0069444445
  %v2787 = vmul.f32 %v2492, 0.0069444445
  %v2788 = vmul.f32 %v2497, 0.0069444445
  %v2789 = vmul.f32 %v2502, 0.0069444445
  %v2790 = vmul.f32 %v2507, 0.0069444445
  %v2791 = vmul.f32 %v2512, 0.0069444445
  %v2792 = vmul.f32 %v2517, 0.0069444445
  %v2793 = vmul.f32 %v2522, 0.0069444445
  %v2794 = vmul.f32 %v2527, 0.0069444445
  %v2795 = vmul.f32 %v2532, 0.0069444445
  %v2796 = vmul.f32 %v2537, 0.0069444445
  %v2797 = vmul.f32 %v2655, 0.0069444445
  %v2798 = vmul.f32 %v2660, 0.0069444445
  %v2799 = vmul.f32 %v2665, 0.0069444445
  %v2800 = vmul.f32 %v2670, 0.0069444445
  %v2801 = vmul.f32 %v2675, 0.0069444445
  %v2802 = vmul.f32 %v2680, 0.0069444445
  %v2803 = vmul.f32 %v2685, 0.0069444445
  %v2804 = vmul.f32 %v2690, 0.0069444445
  %v2805 = vmul.f32 %v2695, 0.0069444445
  %v2806 = vmul.f32 %v2700, 0.0069444445
  %v2807 = vmul.f32 %v2705, 0.0069444445
  %v2808 = vmul.f32 %v2710, 0.0069444445
  %v2809 = vmul.f32 %v2715, 0.0069444445
  %v2810 = vmul.f32 %v2720, 0.0069444445
  %v2811 = vmul.f32 %v2725, 0.0069444445
  %v2812 = vmul.f32 %v2730, 0.0069444445
  %v2813 = vmul.f32 %v2735, 0.0069444445
  %v2814 = vmul.f32 %v2740, 0.0069444445
  %v2815 = vmul.f32 %v2745, 0.0069444445
  %v2816 = vmul.f32 %v2750, 0.0069444445
  %v2817 = vmul.f32 %v2755, 0.0069444445
  %v2818 = vmul.f32 %v2760, 0.0069444445
  %v2819 = vmul.f32 %v2765, 0.0069444445
  %v2820 = vmul.f32 %v2770, 0.0069444445
  %v2821 = vmul.f32 %v2773, %v2773
  %v2822 = vmul.f32 %v2774, %v2774
  %v2823 = vmul.f32 %v2775, %v2775
  %v2824 = vmul.f32 %v2776, %v2776
  %v2825 = vmul.f32 %v2777, %v2777
  %v2826 = vmul.f32 %v2778, %v2778
  %v2827 = vmul.f32 %v2779, %v2779
  %v2828 = vmul.f32 %v2780, %v2780
  %v2829 = vmul.f32 %v2781, %v2781
  %v2830 = vmul.f32 %v2782, %v2782
  %v2831 = vmul.f32 %v2783, %v2783
  %v2832 = vmul.f32 %v2784, %v2784
  %v2833 = vmul.f32 %v2785, %v2785
  %v2834 = vmul.f32 %v2786, %v2786
  %v2835 = vmul.f32 %v2787, %v2787
  %v2836 = vmul.f32 %v2788, %v2788
  %v2837 = vmul.f32 %v2789, %v2789
  %v2838 = vmul.f32 %v2790, %v2790
  %v2839 = vmul.f32 %v2791, %v2791
  %v2840 = vmul.f32 %v2792, %v2792
  %v2841 = vmul.f32 %v2793, %v2793
  %v2842 = vmul.f32 %v2794, %v2794
  %v2843 = vmul.f32 %v2795, %v2795
  %v2844 = vmul.f32 %v2796, %v2796
  %v2845 = vsub.f32 %v2797, %v2821
  %v2846 = vsub.f32 %v2798, %v2822
  %v2847 = vsub.f32 %v2799, %v2823
  %v2848 = vsub.f32 %v2800, %v2824
  %v2849 = vsub.f32 %v2801, %v2825
  %v2850 = vsub.f32 %v2802, %v2826
  %v2851 = vsub.f32 %v2803, %v2827
  %v2852 = vsub.f32 %v2804, %v2828
  %v2853 = vsub.f32 %v2805, %v2829
  %v2854 = vsub.f32 %v2806, %v2830
  %v2855 = vsub.f32 %v2807, %v2831
  %v2856 = vsub.f32 %v2808, %v2832
  %v2857 = vsub.f32 %v2809, %v2833
  %v2858 = vsub.f32 %v2810, %v2834
  %v2859 = vsub.f32 %v2811, %v2835
  %v2860 = vsub.f32 %v2812, %v2836
  %v2861 = vsub.f32 %v2813, %v2837
  %v2862 = vsub.f32 %v2814, %v2838
  %v2863 = vsub.f32 %v2815, %v2839
  %v2864 = vsub.f32 %v2816, %v2840
  %v2865 = vsub.f32 %v2817, %v2841
  %v2866 = vsub.f32 %v2818, %v2842
  %v2867 = vsub.f32 %v2819, %v2843
  %v2868 = vsub.f32 %v2820, %v2844
  %v2869 = vmax.f32 %v2845, 0.0
  %v2870 = vmax.f32 %v2846, 0.0
  %v2871 = vmax.f32 %v2847, 0.0
  %v2872 = vmax.f32 %v2848, 0.0
  %v2873 = vmax.f32 %v2849, 0.0
  %v2874 = vmax.f32 %v2850, 0.0
  %v2875 = vmax.f32 %v2851, 0.0
  %v2876 = vmax.f32 %v2852, 0.0
  %v2877 = vmax.f32 %v2853, 0.0
  %v2878 = vmax.f32 %v2854, 0.0
  %v2879 = vmax.f32 %v2855, 0.0
  %v2880 = vmax.f32 %v2856, 0.0
  %v2881 = vmax.f32 %v2857, 0.0
  %v2882 = vmax.f32 %v2858, 0.0
  %v2883 = vmax.f32 %v2859, 0.0
  %v2884 = vmax.f32 %v2860, 0.0
  %v2885 = vmax.f32 %v2861, 0.0
  %v2886 = vmax.f32 %v2862, 0.0
  %v2887 = vmax.f32 %v2863, 0.0
  %v2888 = vmax.f32 %v2864, 0.0
  %v2889 = vmax.f32 %v2865, 0.0
  %v2890 = vmax.f32 %v2866, 0.0
  %v2891 = vmax.f32 %v2867, 0.0
  %v2892 = vmax.f32 %v2868, 0.0
  %v2893 = vadd.f32 %v2869, 0.001
  %v2894 = vadd.f32 %v2870, 0.001
  %v2895 = vadd.f32 %v2871, 0.001
  %v2896 = vadd.f32 %v2872, 0.001
  %v2897 = vadd.f32 %v2873, 0.001
  %v2898 = vadd.f32 %v2874, 0.001
  %v2899 = vadd.f32 %v2875, 0.001
  %v2900 = vadd.f32 %v2876, 0.001
  %v2901 = vadd.f32 %v2877, 0.001
  %v2902 = vadd.f32 %v2878, 0.001
  %v2903 = vadd.f32 %v2879, 0.001
  %v2904 = vadd.f32 %v2880, 0.001
  %v2905 = vadd.f32 %v2881, 0.001
  %v2906 = vadd.f32 %v2882, 0.001
  %v2907 = vadd.f32 %v2883, 0.001
  %v2908 = vadd.f32 %v2884, 0.001
  %v2909 = vadd.f32 %v2885, 0.001
  %v2910 = vadd.f32 %v2886, 0.001
  %v2911 = vadd.f32 %v2887, 0.001
  %v2912 = vadd.f32 %v2888, 0.001
  %v2913 = vadd.f32 %v2889, 0.001
  %v2914 = vadd.f32 %v2890, 0.001
  %v2915 = vadd.f32 %v2891, 0.001
  %v2916 = vadd.f32 %v2892, 0.001
  %v2917 = vrsqrt.pop %v2893
  %v2918 = vrsqrt.pop %v2894
  %v2919 = vrsqrt.pop %v2895
  %v2920 = vrsqrt.pop %v2896
  %v2921 = vrsqrt.pop %v2897
  %v2922 = vrsqrt.pop %v2898
  %v2923 = vrsqrt.pop %v2899
  %v2924 = vrsqrt.pop %v2900
  %v2925 = vrsqrt.pop %v2901
  %v2926 = vrsqrt.pop %v2902
  %v2927 = vrsqrt.pop %v2903
  %v2928 = vrsqrt.pop %v2904
  %v2929 = vrsqrt.pop %v2905
  %v2930 = vrsqrt.pop %v2906
  %v2931 = vrsqrt.pop %v2907
  %v2932 = vrsqrt.pop %v2908
  %v2933 = vrsqrt.pop %v2909
  %v2934 = vrsqrt.pop %v2910
  %v2935 = vrsqrt.pop %v2911
  %v2936 = vrsqrt.pop %v2912
  %v2937 = vrsqrt.pop %v2913
  %v2938 = vrsqrt.pop %v2914
  %v2939 = vrsqrt.pop %v2915
  %v2940 = vrsqrt.pop %v2916
  %v2941 = vld [vmem:[%s2] sm:$0xff]
  %v2942 = vld [vmem:[%s2 + $0x8] sm:$0xff]
  %v2943 = vld [vmem:[%s2 + $0x10] sm:$0xff]
  %v2944 = vld [vmem:[%s2 + $0x18] sm:$0xff]
  %v2945 = vld [vmem:[%s2 + $0x20] sm:$0xff]
  %v2946 = vld [vmem:[%s2 + $0x28] sm:$0xff]
  %v2947 = vld [vmem:[%s2 + $0x30] sm:$0xff]
  %v2948 = vld [vmem:[%s2 + $0x38] sm:$0xff]
  %v2949 = vld [vmem:[%s2 + $0x40] sm:$0xff]
  %v2950 = vld [vmem:[%s2 + $0x48] sm:$0xff]
  %v2951 = vld [vmem:[%s2 + $0x50] sm:$0xff]
  %v2952 = vld [vmem:[%s2 + $0x58] sm:$0xff]
  %v2953 = vld [vmem:[%s2 + $0x60] sm:$0xff]
  %v2954 = vld [vmem:[%s2 + $0x68] sm:$0xff]
  %v2955 = vld [vmem:[%s2 + $0x70] sm:$0xff]
  %v2956 = vld [vmem:[%s2 + $0x78] sm:$0xff]
  %v2957 = vld [vmem:[%s2 + $0x80] sm:$0xff]
  %v2958 = vld [vmem:[%s2 + $0x88] sm:$0xff]
  %v2959 = vld [vmem:[%s2 + $0x90] sm:$0xff]
  %v2960 = vld [vmem:[%s2 + $0x98] sm:$0xff]
  %v2961 = vld [vmem:[%s2 + $0xa0] sm:$0xff]
  %v2962 = vld [vmem:[%s2 + $0xa8] sm:$0xff]
  %v2963 = vld [vmem:[%s2 + $0xb0] sm:$0xff]
  %v2964 = vld [vmem:[%s2 + $0xb8] sm:$0xff]
  %v2965 = vmul.f32 %v2941, %v2917
  %v2966 = vmul.f32 %v2942, %v2918
  %v2967 = vmul.f32 %v2943, %v2919
  %v2968 = vmul.f32 %v2944, %v2920
  %v2969 = vmul.f32 %v2945, %v2921
  %v2970 = vmul.f32 %v2946, %v2922
  %v2971 = vmul.f32 %v2947, %v2923
  %v2972 = vmul.f32 %v2948, %v2924
  %v2973 = vmul.f32 %v2949, %v2925
  %v2974 = vmul.f32 %v2950, %v2926
  %v2975 = vmul.f32 %v2951, %v2927
  %v2976 = vmul.f32 %v2952, %v2928
  %v2977 = vmul.f32 %v2953, %v2929
  %v2978 = vmul.f32 %v2954, %v2930
  %v2979 = vmul.f32 %v2955, %v2931
  %v2980 = vmul.f32 %v2956, %v2932
  %v2981 = vmul.f32 %v2957, %v2933
  %v2982 = vmul.f32 %v2958, %v2934
  %v2983 = vmul.f32 %v2959, %v2935
  %v2984 = vmul.f32 %v2960, %v2936
  %v2985 = vmul.f32 %v2961, %v2937
  %v2986 = vmul.f32 %v2962, %v2938
  %v2987 = vmul.f32 %v2963, %v2939
  %v2988 = vmul.f32 %v2964, %v2940
  %v2989 = vld [vmem:[%s3] sm:$0xff]
  %v2990 = vld [vmem:[%s3 + $0x8] sm:$0xff]
  %v2991 = vld [vmem:[%s3 + $0x10] sm:$0xff]
  %v2992 = vld [vmem:[%s3 + $0x18] sm:$0xff]
  %v2993 = vld [vmem:[%s3 + $0x20] sm:$0xff]
  %v2994 = vld [vmem:[%s3 + $0x28] sm:$0xff]
  %v2995 = vld [vmem:[%s3 + $0x30] sm:$0xff]
  %v2996 = vld [vmem:[%s3 + $0x38] sm:$0xff]
  %v2997 = vld [vmem:[%s3 + $0x40] sm:$0xff]
  %v2998 = vld [vmem:[%s3 + $0x48] sm:$0xff]
  %v2999 = vld [vmem:[%s3 + $0x50] sm:$0xff]
  %v3000 = vld [vmem:[%s3 + $0x58] sm:$0xff]
  %v3001 = vld [vmem:[%s3 + $0x60] sm:$0xff]
  %v3002 = vld [vmem:[%s3 + $0x68] sm:$0xff]
  %v3003 = vld [vmem:[%s3 + $0x70] sm:$0xff]
  %v3004 = vld [vmem:[%s3 + $0x78] sm:$0xff]
  %v3005 = vld [vmem:[%s3 + $0x80] sm:$0xff]
  %v3006 = vld [vmem:[%s3 + $0x88] sm:$0xff]
  %v3007 = vld [vmem:[%s3 + $0x90] sm:$0xff]
  %v3008 = vld [vmem:[%s3 + $0x98] sm:$0xff]
  %v3009 = vld [vmem:[%s3 + $0xa0] sm:$0xff]
  %v3010 = vld [vmem:[%s3 + $0xa8] sm:$0xff]
  %v3011 = vld [vmem:[%s3 + $0xb0] sm:$0xff]
  %v3012 = vld [vmem:[%s3 + $0xb8] sm:$0xff]
  %v3013 = vmul.f32 %v2773, %v2965
  %v3014 = vmul.f32 %v2774, %v2966
  %v3015 = vmul.f32 %v2775, %v2967
  %v3016 = vmul.f32 %v2776, %v2968
  %v3017 = vmul.f32 %v2777, %v2969
  %v3018 = vmul.f32 %v2778, %v2970
  %v3019 = vmul.f32 %v2779, %v2971
  %v3020 = vmul.f32 %v2780, %v2972
  %v3021 = vmul.f32 %v2781, %v2973
  %v3022 = vmul.f32 %v2782, %v2974
  %v3023 = vmul.f32 %v2783, %v2975
  %v3024 = vmul.f32 %v2784, %v2976
  %v3025 = vmul.f32 %v2785, %v2977
  %v3026 = vmul.f32 %v2786, %v2978
  %v3027 = vmul.f32 %v2787, %v2979
  %v3028 = vmul.f32 %v2788, %v2980
  %v3029 = vmul.f32 %v2789, %v2981
  %v3030 = vmul.f32 %v2790, %v2982
  %v3031 = vmul.f32 %v2791, %v2983
  %v3032 = vmul.f32 %v2792, %v2984
  %v3033 = vmul.f32 %v2793, %v2985
  %v3034 = vmul.f32 %v2794, %v2986
  %v3035 = vmul.f32 %v2795, %v2987
  %v3036 = vmul.f32 %v2796, %v2988
  %v3037 = vsub.f32 %v2989, %v3013
  %v3038 = vsub.f32 %v2990, %v3014
  %v3039 = vsub.f32 %v2991, %v3015
  %v3040 = vsub.f32 %v2992, %v3016
  %v3041 = vsub.f32 %v2993, %v3017
  %v3042 = vsub.f32 %v2994, %v3018
  %v3043 = vsub.f32 %v2995, %v3019
  %v3044 = vsub.f32 %v2996, %v3020
  %v3045 = vsub.f32 %v2997, %v3021
  %v3046 = vsub.f32 %v2998, %v3022
  %v3047 = vsub.f32 %v2999, %v3023
  %v3048 = vsub.f32 %v3000, %v3024
  %v3049 = vsub.f32 %v3001, %v3025
  %v3050 = vsub.f32 %v3002, %v3026
  %v3051 = vsub.f32 %v3003, %v3027
  %v3052 = vsub.f32 %v3004, %v3028
  %v3053 = vsub.f32 %v3005, %v3029
  %v3054 = vsub.f32 %v3006, %v3030
  %v3055 = vsub.f32 %v3007, %v3031
  %v3056 = vsub.f32 %v3008, %v3032
  %v3057 = vsub.f32 %v3009, %v3033
  %v3058 = vsub.f32 %v3010, %v3034
  %v3059 = vsub.f32 %v3011, %v3035
  %v3060 = vsub.f32 %v3012, %v3036
  %3062 = vset.pattern.permute.xlu0 0
  %3063 = vperm.xlu0 %3062, %v2965
  %v3064 = vpop.permute.xlu0 %3063
  %3067 = vset.pattern.permute.xlu0 0
  %3068 = vperm.xlu0 %3067, %v2966
  %v3069 = vpop.permute.xlu0 %3068
  %3072 = vset.pattern.permute.xlu0 0
  %3073 = vperm.xlu0 %3072, %v2967
  %v3074 = vpop.permute.xlu0 %3073
  %3077 = vset.pattern.permute.xlu0 0
  %3078 = vperm.xlu0 %3077, %v2968
  %v3079 = vpop.permute.xlu0 %3078
  %3082 = vset.pattern.permute.xlu0 0
  %3083 = vperm.xlu0 %3082, %v2969
  %v3084 = vpop.permute.xlu0 %3083
  %3087 = vset.pattern.permute.xlu0 0
  %3088 = vperm.xlu0 %3087, %v2970
  %v3089 = vpop.permute.xlu0 %3088
  %3092 = vset.pattern.permute.xlu0 0
  %3093 = vperm.xlu0 %3092, %v2971
  %v3094 = vpop.permute.xlu0 %3093
  %3097 = vset.pattern.permute.xlu0 0
  %3098 = vperm.xlu0 %3097, %v2972
  %v3099 = vpop.permute.xlu0 %3098
  %3102 = vset.pattern.permute.xlu0 0
  %3103 = vperm.xlu0 %3102, %v2973
  %v3104 = vpop.permute.xlu0 %3103
  %3107 = vset.pattern.permute.xlu0 0
  %3108 = vperm.xlu0 %3107, %v2974
  %v3109 = vpop.permute.xlu0 %3108
  %3112 = vset.pattern.permute.xlu0 0
  %3113 = vperm.xlu0 %3112, %v2975
  %v3114 = vpop.permute.xlu0 %3113
  %3117 = vset.pattern.permute.xlu0 0
  %3118 = vperm.xlu0 %3117, %v2976
  %v3119 = vpop.permute.xlu0 %3118
  %3122 = vset.pattern.permute.xlu0 0
  %3123 = vperm.xlu0 %3122, %v2977
  %v3124 = vpop.permute.xlu0 %3123
  %3127 = vset.pattern.permute.xlu0 0
  %3128 = vperm.xlu0 %3127, %v2978
  %v3129 = vpop.permute.xlu0 %3128
  %3132 = vset.pattern.permute.xlu0 0
  %3133 = vperm.xlu0 %3132, %v2979
  %v3134 = vpop.permute.xlu0 %3133
  %3137 = vset.pattern.permute.xlu0 0
  %3138 = vperm.xlu0 %3137, %v2980
  %v3139 = vpop.permute.xlu0 %3138
  %3142 = vset.pattern.permute.xlu0 0
  %3143 = vperm.xlu0 %3142, %v2981
  %v3144 = vpop.permute.xlu0 %3143
  %3147 = vset.pattern.permute.xlu0 0
  %3148 = vperm.xlu0 %3147, %v2982
  %v3149 = vpop.permute.xlu0 %3148
  %3152 = vset.pattern.permute.xlu0 0
  %3153 = vperm.xlu0 %3152, %v2983
  %v3154 = vpop.permute.xlu0 %3153
  %3157 = vset.pattern.permute.xlu0 0
  %3158 = vperm.xlu0 %3157, %v2984
  %v3159 = vpop.permute.xlu0 %3158
  %3162 = vset.pattern.permute.xlu0 0
  %3163 = vperm.xlu0 %3162, %v2985
  %v3164 = vpop.permute.xlu0 %3163
  %3167 = vset.pattern.permute.xlu0 0
  %3168 = vperm.xlu0 %3167, %v2986
  %v3169 = vpop.permute.xlu0 %3168
  %3172 = vset.pattern.permute.xlu0 0
  %3173 = vperm.xlu0 %3172, %v2987
  %v3174 = vpop.permute.xlu0 %3173
  %3177 = vset.pattern.permute.xlu0 0
  %3178 = vperm.xlu0 %3177, %v2988
  %v3179 = vpop.permute.xlu0 %3178
  %v3181 = vmul.f32 %v2205, %v3064
  %v3182 = vmul.f32 %v2207, %v3064
  %v3183 = vmul.f32 %v2209, %v3069
  %v3184 = vmul.f32 %v2211, %v3069
  %v3185 = vmul.f32 %v2215, %v3074
  %v3186 = vmul.f32 %v2217, %v3074
  %v3187 = vmul.f32 %v2219, %v3079
  %v3188 = vmul.f32 %v2221, %v3079
  %v3189 = vmul.f32 %v2225, %v3084
  %v3190 = vmul.f32 %v2227, %v3084
  %v3191 = vmul.f32 %v2229, %v3089
  %v3192 = vmul.f32 %v2231, %v3089
  %v3193 = vmul.f32 %v2235, %v3094
  %v3194 = vmul.f32 %v2237, %v3094
  %v3195 = vmul.f32 %v2239, %v3099
  %v3196 = vmul.f32 %v2241, %v3099
  %v3197 = vmul.f32 %v2245, %v3104
  %v3198 = vmul.f32 %v2247, %v3104
  %v3199 = vmul.f32 %v2249, %v3109
  %v3200 = vmul.f32 %v2251, %v3109
  %v3201 = vmul.f32 %v2255, %v3114
  %v3202 = vmul.f32 %v2257, %v3114
  %v3203 = vmul.f32 %v2259, %v3119
  %v3204 = vmul.f32 %v2261, %v3119
  %v3205 = vmul.f32 %v2265, %v3124
  %v3206 = vmul.f32 %v2267, %v3124
  %v3207 = vmul.f32 %v2269, %v3129
  %v3208 = vmul.f32 %v2271, %v3129
  %v3209 = vmul.f32 %v2275, %v3134
  %v3210 = vmul.f32 %v2277, %v3134
  %v3211 = vmul.f32 %v2279, %v3139
  %v3212 = vmul.f32 %v2281, %v3139
  %v3213 = vmul.f32 %v2285, %v3144
  %v3214 = vmul.f32 %v2287, %v3144
  %v3215 = vmul.f32 %v2289, %v3149
  %v3216 = vmul.f32 %v2291, %v3149
  %v3217 = vmul.f32 %v2295, %v3154
  %v3218 = vmul.f32 %v2297, %v3154
  %v3219 = vmul.f32 %v2299, %v3159
  %v3220 = vmul.f32 %v2301, %v3159
  %v3221 = vmul.f32 %v2305, %v3164
  %v3222 = vmul.f32 %v2307, %v3164
  %v3223 = vmul.f32 %v2309, %v3169
  %v3224 = vmul.f32 %v2311, %v3169
  %v3225 = vmul.f32 %v2315, %v3174
  %v3226 = vmul.f32 %v2317, %v3174
  %v3227 = vmul.f32 %v2319, %v3179
  %v3228 = vmul.f32 %v2321, %v3179
  %3230 = vset.pattern.permute.xlu0 0
  %3231 = vperm.xlu0 %3230, %v3037
  %v3232 = vpop.permute.xlu0 %3231
  %3235 = vset.pattern.permute.xlu0 0
  %3236 = vperm.xlu0 %3235, %v3038
  %v3237 = vpop.permute.xlu0 %3236
  %3240 = vset.pattern.permute.xlu0 0
  %3241 = vperm.xlu0 %3240, %v3039
  %v3242 = vpop.permute.xlu0 %3241
  %3245 = vset.pattern.permute.xlu0 0
  %3246 = vperm.xlu0 %3245, %v3040
  %v3247 = vpop.permute.xlu0 %3246
  %3250 = vset.pattern.permute.xlu0 0
  %3251 = vperm.xlu0 %3250, %v3041
  %v3252 = vpop.permute.xlu0 %3251
  %3255 = vset.pattern.permute.xlu0 0
  %3256 = vperm.xlu0 %3255, %v3042
  %v3257 = vpop.permute.xlu0 %3256
  %3260 = vset.pattern.permute.xlu0 0
  %3261 = vperm.xlu0 %3260, %v3043
  %v3262 = vpop.permute.xlu0 %3261
  %3265 = vset.pattern.permute.xlu0 0
  %3266 = vperm.xlu0 %3265, %v3044
  %v3267 = vpop.permute.xlu0 %3266
  %3270 = vset.pattern.permute.xlu0 0
  %3271 = vperm.xlu0 %3270, %v3045
  %v3272 = vpop.permute.xlu0 %3271
  %3275 = vset.pattern.permute.xlu0 0
  %3276 = vperm.xlu0 %3275, %v3046
  %v3277 = vpop.permute.xlu0 %3276
  %3280 = vset.pattern.permute.xlu0 0
  %3281 = vperm.xlu0 %3280, %v3047
  %v3282 = vpop.permute.xlu0 %3281
  %3285 = vset.pattern.permute.xlu0 0
  %3286 = vperm.xlu0 %3285, %v3048
  %v3287 = vpop.permute.xlu0 %3286
  %3290 = vset.pattern.permute.xlu0 0
  %3291 = vperm.xlu0 %3290, %v3049
  %v3292 = vpop.permute.xlu0 %3291
  %3295 = vset.pattern.permute.xlu0 0
  %3296 = vperm.xlu0 %3295, %v3050
  %v3297 = vpop.permute.xlu0 %3296
  %3300 = vset.pattern.permute.xlu0 0
  %3301 = vperm.xlu0 %3300, %v3051
  %v3302 = vpop.permute.xlu0 %3301
  %3305 = vset.pattern.permute.xlu0 0
  %3306 = vperm.xlu0 %3305, %v3052
  %v3307 = vpop.permute.xlu0 %3306
  %3310 = vset.pattern.permute.xlu0 0
  %3311 = vperm.xlu0 %3310, %v3053
  %v3312 = vpop.permute.xlu0 %3311
  %3315 = vset.pattern.permute.xlu0 0
  %3316 = vperm.xlu0 %3315, %v3054
  %v3317 = vpop.permute.xlu0 %3316
  %3320 = vset.pattern.permute.xlu0 0
  %3321 = vperm.xlu0 %3320, %v3055
  %v3322 = vpop.permute.xlu0 %3321
  %3325 = vset.pattern.permute.xlu0 0
  %3326 = vperm.xlu0 %3325, %v3056
  %v3327 = vpop.permute.xlu0 %3326
  %3330 = vset.pattern.permute.xlu0 0
  %3331 = vperm.xlu0 %3330, %v3057
  %v3332 = vpop.permute.xlu0 %3331
  %3335 = vset.pattern.permute.xlu0 0
  %3336 = vperm.xlu0 %3335, %v3058
  %v3337 = vpop.permute.xlu0 %3336
  %3340 = vset.pattern.permute.xlu0 0
  %3341 = vperm.xlu0 %3340, %v3059
  %v3342 = vpop.permute.xlu0 %3341
  %3345 = vset.pattern.permute.xlu0 0
  %3346 = vperm.xlu0 %3345, %v3060
  %v3347 = vpop.permute.xlu0 %3346
  %v3349 = vadd.f32 %v3181, %v3232
  %v3350 = vadd.f32 %v3182, %v3232
  %v3351 = vadd.f32 %v3183, %v3237
  %v3352 = vadd.f32 %v3184, %v3237
  %v3353 = vadd.f32 %v3185, %v3242
  %v3354 = vadd.f32 %v3186, %v3242
  %v3355 = vadd.f32 %v3187, %v3247
  %v3356 = vadd.f32 %v3188, %v3247
  %v3357 = vadd.f32 %v3189, %v3252
  %v3358 = vadd.f32 %v3190, %v3252
  %v3359 = vadd.f32 %v3191, %v3257
  %v3360 = vadd.f32 %v3192, %v3257
  %v3361 = vadd.f32 %v3193, %v3262
  %v3362 = vadd.f32 %v3194, %v3262
  %v3363 = vadd.f32 %v3195, %v3267
  %v3364 = vadd.f32 %v3196, %v3267
  %v3365 = vadd.f32 %v3197, %v3272
  %v3366 = vadd.f32 %v3198, %v3272
  %v3367 = vadd.f32 %v3199, %v3277
  %v3368 = vadd.f32 %v3200, %v3277
  %v3369 = vadd.f32 %v3201, %v3282
  %v3370 = vadd.f32 %v3202, %v3282
  %v3371 = vadd.f32 %v3203, %v3287
  %v3372 = vadd.f32 %v3204, %v3287
  %v3373 = vadd.f32 %v3205, %v3292
  %v3374 = vadd.f32 %v3206, %v3292
  %v3375 = vadd.f32 %v3207, %v3297
  %v3376 = vadd.f32 %v3208, %v3297
  %v3377 = vadd.f32 %v3209, %v3302
  %v3378 = vadd.f32 %v3210, %v3302
  %v3379 = vadd.f32 %v3211, %v3307
  %v3380 = vadd.f32 %v3212, %v3307
  %v3381 = vadd.f32 %v3213, %v3312
  %v3382 = vadd.f32 %v3214, %v3312
  %v3383 = vadd.f32 %v3215, %v3317
  %v3384 = vadd.f32 %v3216, %v3317
  %v3385 = vadd.f32 %v3217, %v3322
  %v3386 = vadd.f32 %v3218, %v3322
  %v3387 = vadd.f32 %v3219, %v3327
  %v3388 = vadd.f32 %v3220, %v3327
  %v3389 = vadd.f32 %v3221, %v3332
  %v3390 = vadd.f32 %v3222, %v3332
  %v3391 = vadd.f32 %v3223, %v3337
  %v3392 = vadd.f32 %v3224, %v3337
  %v3393 = vadd.f32 %v3225, %v3342
  %v3394 = vadd.f32 %v3226, %v3342
  %v3395 = vadd.f32 %v3227, %v3347
  %v3396 = vadd.f32 %v3228, %v3347
  %3397 = vst [vmem:[%s5] sm:$0xff] %v3349
  %3398 = vst [vmem:[%s5 + $0x8] sm:$0xff] %v3350
  %3399 = vst [vmem:[%s5 + $0x10] sm:$0xff] %v3351
  %3400 = vst [vmem:[%s5 + $0x18] sm:$0xff] %v3352
  %3401 = vst [vmem:[%s5 + $0x20] sm:$0xff] %v3353
  %3402 = vst [vmem:[%s5 + $0x28] sm:$0xff] %v3354
  %3403 = vst [vmem:[%s5 + $0x30] sm:$0xff] %v3355
  %3404 = vst [vmem:[%s5 + $0x38] sm:$0xff] %v3356
  %3405 = vst [vmem:[%s5 + $0x40] sm:$0xff] %v3357
  %3406 = vst [vmem:[%s5 + $0x48] sm:$0xff] %v3358
  %3407 = vst [vmem:[%s5 + $0x50] sm:$0xff] %v3359
  %3408 = vst [vmem:[%s5 + $0x58] sm:$0xff] %v3360
  %3409 = vst [vmem:[%s5 + $0x60] sm:$0xff] %v3361
  %3410 = vst [vmem:[%s5 + $0x68] sm:$0xff] %v3362
  %3411 = vst [vmem:[%s5 + $0x70] sm:$0xff] %v3363
  %3412 = vst [vmem:[%s5 + $0x78] sm:$0xff] %v3364
  %3413 = vst [vmem:[%s5 + $0x80] sm:$0xff] %v3365
  %3414 = vst [vmem:[%s5 + $0x88] sm:$0xff] %v3366
  %3415 = vst [vmem:[%s5 + $0x90] sm:$0xff] %v3367
  %3416 = vst [vmem:[%s5 + $0x98] sm:$0xff] %v3368
  %3417 = vst [vmem:[%s5 + $0xa0] sm:$0xff] %v3369
  %3418 = vst [vmem:[%s5 + $0xa8] sm:$0xff] %v3370
  %3419 = vst [vmem:[%s5 + $0xb0] sm:$0xff] %v3371
  %3420 = vst [vmem:[%s5 + $0xb8] sm:$0xff] %v3372
  %3421 = vst [vmem:[%s5 + $0xc0] sm:$0xff] %v3373
  %3422 = vst [vmem:[%s5 + $0xc8] sm:$0xff] %v3374
  %3423 = vst [vmem:[%s5 + $0xd0] sm:$0xff] %v3375
  %3424 = vst [vmem:[%s5 + $0xd8] sm:$0xff] %v3376
  %3425 = vst [vmem:[%s5 + $0xe0] sm:$0xff] %v3377
  %3426 = vst [vmem:[%s5 + $0xe8] sm:$0xff] %v3378
  %3427 = vst [vmem:[%s5 + $0xf0] sm:$0xff] %v3379
  %3428 = vst [vmem:[%s5 + $0xf8] sm:$0xff] %v3380
  %3429 = vst [vmem:[%s5 + $0x100] sm:$0xff] %v3381
  %3430 = vst [vmem:[%s5 + $0x108] sm:$0xff] %v3382
  %3431 = vst [vmem:[%s5 + $0x110] sm:$0xff] %v3383
  %3432 = vst [vmem:[%s5 + $0x118] sm:$0xff] %v3384
  %3433 = vst [vmem:[%s5 + $0x120] sm:$0xff] %v3385
  %3434 = vst [vmem:[%s5 + $0x128] sm:$0xff] %v3386
  %3435 = vst [vmem:[%s5 + $0x130] sm:$0xff] %v3387
  %3436 = vst [vmem:[%s5 + $0x138] sm:$0xff] %v3388
  %3437 = vst [vmem:[%s5 + $0x140] sm:$0xff] %v3389
  %3438 = vst [vmem:[%s5 + $0x148] sm:$0xff] %v3390
  %3439 = vst [vmem:[%s5 + $0x150] sm:$0xff] %v3391
  %3440 = vst [vmem:[%s5 + $0x158] sm:$0xff] %v3392
  %3441 = vst [vmem:[%s5 + $0x160] sm:$0xff] %v3393
  %3442 = vst [vmem:[%s5 + $0x168] sm:$0xff] %v3394
  %3443 = vst [vmem:[%s5 + $0x170] sm:$0xff] %v3395
  %3444 = vst [vmem:[%s5 + $0x178] sm:$0xff] %v3396
  // Predicated region
  $region22: #{conv2d_1x7_batchnorm.1} parent=0 // pred_check
    _
  $region23: #{conv2d_1x7_batchnorm.1} parent=0 // pred_check_branch
    %3446 = sbr.rel (0) target = $region25
  $region24: #{conv2d_1x7_batchnorm.1} parent=0 // pred_region
    _
  $region25: #{conv2d_1x7_batchnorm.1} parent=0 // pred_fallthru
    _
  // Predicated region
  $region26: #{conv2d_1x7_batchnorm.1} parent=0 // pred_check
    _
  $region27: #{conv2d_1x7_batchnorm.1} parent=0 // pred_check_branch
    %3448 = sbr.rel (0) target = $region29
  $region28: #{conv2d_1x7_batchnorm.1} parent=0 // pred_region
    _
  $region29: #{conv2d_1x7_batchnorm.1} parent=0 // pred_fallthru
    _

</llo_original>
